<compile_context>
chip_gen: v6e
topology: v6e:2x2x1
jax: 0.10.0
libtpu: 0.0.40
codegen_flags: <defaults>
</compile_context>

<pallas_src>
import functools
from typing import NamedTuple

import jax
import jax.numpy as jnp
from jax.experimental import pallas as pl
from jax.experimental.pallas import tpu as pltpu

_LANE = 128
_SUBLANE_BF16 = 16          # bf16 packs 16 rows per vreg
_NEG_PAD = -1e9             # bias for padded class columns -> softmax weight ~ 0
_VMEM_BUDGET = 48 * 1024 * 1024   # scoped budget safe for v7x's 64 MiB VMEM
_B_TILE_MAX = 256           # max batch tile (v6e/v7x MXU friendly)


def _round_up(x, m):
    return (x + m - 1) // m * m


def _choose_d_tile(D, n_fused, k_pad, requested=512, b_tile=_B_TILE_MAX,
                   vmem_budget=_VMEM_BUDGET):
    """Largest D tile (multiple of 128) whose double-buffered working set fits."""
    d_tile = min(requested, _round_up(D, _LANE))
    d_tile = _round_up(d_tile, _LANE)
    while d_tile > _LANE:
        w_bytes = 2 * d_tile * n_fused * 2          # double-buffered bf16 weights
        x_bytes = 2 * b_tile * d_tile * 2           # double-buffered bf16 x tile
        acc_bytes = b_tile * n_fused * 4            # resident f32 accumulator
        out_bytes = 3 * 2 * b_tile * k_pad * 4      # double-buffered f32 outputs
        b_bytes = 2 * n_fused * 4                   # bias
        if w_bytes + x_bytes + acc_bytes + out_bytes + b_bytes <= vmem_budget:
            break
        d_tile //= 2
    return max(d_tile, _LANE)


class PackedDistillParams(NamedTuple):
    """Weights pre-packed ONCE at init into the kernel's lane-dense layout."""
    w_fused: jax.Array      # (D_pad, (T+1)*K_pad) bf16; teachers 0..T-1, student last
    b_fused: jax.Array      # (1, (T+1)*K_pad) f32; pad columns = -1e9
    w_student: jax.Array    # (D_pad, K_pad) bf16
    b_student: jax.Array    # (1, K_pad) f32
    num_teachers: int
    d_in: int               # original D
    k_out: int              # original K
    k_pad: int
    d_pad: int
    d_tile: int


def pack_distillation_params(student_w, student_b, teacher_ws, teacher_bs,
                             d_tile=512):
    """Pack student + teacher linear params into the fused kernel layout.

    student_w: [D, K], student_b: [K]
    teacher_ws: [T, D, K], teacher_bs: [T, K]
    """
    T, D, K = teacher_ws.shape
    if T == 0:
        raise ValueError("need at least one teacher")

    K_pad = _round_up(K, _LANE)
    n_fused = (T + 1) * K_pad
    d_tile = _choose_d_tile(D, n_fused, K_pad, requested=d_tile)
    D_pad = _round_up(D, d_tile)

    # Single concat + pad + transpose (no per-call dynamic-update-slice loop).
    all_w = jnp.concatenate([teacher_ws, student_w[None]], axis=0)      # (T+1, D, K)
    all_w = jnp.pad(all_w.astype(jnp.bfloat16),
                    ((0, 0), (0, D_pad - D), (0, K_pad - K)))           # (T+1, D_pad, K_pad)
    w_fused = jnp.transpose(all_w, (1, 0, 2)).reshape(D_pad, n_fused)

    all_b = jnp.concatenate([teacher_bs, student_b[None]], axis=0).astype(jnp.float32)
    all_b = jnp.pad(all_b, ((0, 0), (0, K_pad - K)), constant_values=_NEG_PAD)
    b_fused = all_b.reshape(1, n_fused)

    return PackedDistillParams(
        w_fused=w_fused,
        b_fused=b_fused,
        w_student=all_w[T],
        b_student=all_b[T:T + 1],
        num_teachers=T, d_in=D, k_out=K,
        k_pad=K_pad, d_pad=D_pad, d_tile=d_tile)


def _distill_fused_kernel(x_ref, w_ref, b_ref,
                          model_out_ref, soft_labels_ref, soft_logits_ref,
                          acc_ref, *, num_teachers, k_pad):
    """Grid = (batch 'parallel', D 'arbitrary' reduction).

    x_ref:   (B_tile, tD)            bf16 input tile
    w_ref:   (tD, (T+1)*K_pad)       bf16 fused weights (teachers 0..T-1, student last)
    b_ref:   (1, (T+1)*K_pad)        f32 fused bias (pad columns = -1e9)
    acc_ref: (B_tile, (T+1)*K_pad)   f32 accumulator (VMEM scratch)
    outputs: (B_tile, K_pad) each, resident across the D axis.
    """
    d = pl.program_id(1)

    @pl.when(d == 0)
    def _():
        acc_ref[...] = jnp.zeros_like(acc_ref)

    # Single lane-dense MXU matmul over the fused class slab.
    acc_ref[...] += jnp.dot(x_ref[...], w_ref[...],
                            preferred_element_type=jnp.float32)

    @pl.when(d == pl.num_programs(1) - 1)
    def _():
        # Student slab: last K_pad-wide slice (bias added per-slab, no full temp).
        s0 = num_teachers * k_pad
        model_out_ref[...] = acc_ref[:, s0:s0 + k_pad] + b_ref[:, s0:s0 + k_pad]

        # Teacher slabs: per-slab bias + softmax, then average probs & raw logits.
        sum_probs = jnp.zeros_like(soft_labels_ref)
        sum_logits = jnp.zeros_like(soft_logits_ref)
        for t in range(num_teachers):  # small static loop, fully unrolled
            c0 = t * k_pad
            lg = acc_ref[:, c0:c0 + k_pad] + b_ref[:, c0:c0 + k_pad]
            m = jnp.max(lg, axis=-1, keepdims=True)
            e = jnp.exp(lg - m)
            denom = jnp.sum(e, axis=-1, keepdims=True)
            sum_probs = sum_probs + e * pl.reciprocal(denom, approx=True)
            sum_logits = sum_logits + lg

        inv_t = jnp.float32(1.0 / num_teachers)
        soft_labels_ref[...] = sum_probs * inv_t
        soft_logits_ref[...] = sum_logits * inv_t


def _student_kernel(x_ref, w_ref, b_ref, out_ref, acc_ref):
    """Student-only forward (eval path). Grid = (batch, D)."""
    d = pl.program_id(1)

    @pl.when(d == 0)
    def _():
        acc_ref[...] = jnp.zeros_like(acc_ref)

    acc_ref[...] += jnp.dot(x_ref[...], w_ref[...],
                            preferred_element_type=jnp.float32)

    @pl.when(d == pl.num_programs(1) - 1)
    def _():
        out_ref[...] = acc_ref[...] + b_ref[...]


def _pad_input(x_flat, B_pad, D_pad):
    x_bf = x_flat.astype(jnp.bfloat16)
    B, D = x_bf.shape
    if B == B_pad and D == D_pad:
        return x_bf                       # already aligned: no extra HBM pass
    return jnp.pad(x_bf, ((0, B_pad - B), (0, D_pad - D)))


def distillation_forward(x_nchw, params: PackedDistillParams,
                         training=True, before=False):
    """Mirrors ModelDistillationWrapper.forward with combine=True.

    x_nchw: [B, C, H, W]; params: output of pack_distillation_params (built once).
    """
    B = x_nchw.shape[0]
    x_flat = x_nchw.reshape(B, -1)
    D = x_flat.shape[1]
    if D != params.d_in:
        raise ValueError("input feature size mismatch with packed params")

    T = params.num_teachers
    K, K_pad = params.k_out, params.k_pad
    D_pad, d_tile = params.d_pad, params.d_tile
    num_d = D_pad // d_tile

    # Batch tiling: parallel grid axis (feeds v7x's second TensorCore) and caps
    # the f32 accumulator at (B_tile, N_fused).
    B_tile = min(_B_TILE_MAX, _round_up(B, _SUBLANE_BF16))
    B_pad = _round_up(B, B_tile)
    num_b = B_pad // B_tile

    x_p = _pad_input(x_flat, B_pad, D_pad)

    compiler_params = pltpu.CompilerParams(
        dimension_semantics=("parallel", "arbitrary"),
        vmem_limit_bytes=64 * 1024 * 1024,
    )

    if not training:
        # Eval path: student-only kernel (no teacher DMA / MXU work).
        out = pl.pallas_call(
            _student_kernel,
            out_shape=jax.ShapeDtypeStruct((B_pad, K_pad), jnp.float32),
            grid_spec=pltpu.PrefetchScalarGridSpec(
                num_scalar_prefetch=0,
                grid=(num_b, num_d),
                in_specs=[
                    pl.BlockSpec((B_tile, d_tile), lambda b, d: (b, d)),
                    pl.BlockSpec((d_tile, K_pad), lambda b, d: (d, 0)),
                    pl.BlockSpec((1, K_pad), lambda b, d: (0, 0)),
                ],
                out_specs=pl.BlockSpec((B_tile, K_pad), lambda b, d: (b, 0)),
                scratch_shapes=[pltpu.VMEM((B_tile, K_pad), jnp.float32)],
            ),
            compiler_params=compiler_params,
        )(x_p, params.w_student, params.b_student)
        return out[:B, :K]

    # Training path: one fused lane-dense matmul per (batch, D) block.
    N_fused = (T + 1) * K_pad
    out_shapes = (
        jax.ShapeDtypeStruct((B_pad, K_pad), jnp.float32),  # model_output
        jax.ShapeDtypeStruct((B_pad, K_pad), jnp.float32),  # soft_labels (mean softmax)
        jax.ShapeDtypeStruct((B_pad, K_pad), jnp.float32),  # soft_labels_ (mean logits)
    )

    grid_spec = pltpu.PrefetchScalarGridSpec(
        num_scalar_prefetch=0,
        grid=(num_b, num_d),
        in_specs=[
            pl.BlockSpec((B_tile, d_tile), lambda b, d: (b, d)),    # x tile
            pl.BlockSpec((d_tile, N_fused), lambda b, d: (d, 0)),   # fused weights
            pl.BlockSpec((1, N_fused), lambda b, d: (0, 0)),        # fused bias
        ],
        out_specs=[
            pl.BlockSpec((B_tile, K_pad), lambda b, d: (b, 0)),
            pl.BlockSpec((B_tile, K_pad), lambda b, d: (b, 0)),
            pl.BlockSpec((B_tile, K_pad), lambda b, d: (b, 0)),
        ],
        scratch_shapes=[pltpu.VMEM((B_tile, N_fused), jnp.float32)],
    )

    model_out, soft_labels, soft_logits = pl.pallas_call(
        functools.partial(_distill_fused_kernel, num_teachers=T, k_pad=K_pad),
        out_shape=out_shapes,
        grid_spec=grid_spec,
        compiler_params=compiler_params,
    )(x_p, params.w_fused, params.b_fused)

    model_out = model_out[:B, :K]
    soft_labels = soft_labels[:B, :K]
    soft_logits = soft_logits[:B, :K]

    if before:
        return model_out, soft_labels, soft_logits
    return model_out, soft_labels


def _reference(x_nchw, student_w, student_b, teacher_ws, teacher_bs):
    """Pure-JAX reference (on the same bf16-rounded inputs the kernel sees)."""
    B = x_nchw.shape[0]
    x = x_nchw.reshape(B, -1).astype(jnp.bfloat16).astype(jnp.float32)
    sw = student_w.astype(jnp.bfloat16).astype(jnp.float32)
    tw = teacher_ws.astype(jnp.bfloat16).astype(jnp.float32)
    model_out = x @ sw + student_b[None, :]
    t_logits = jnp.einsum("bd,tdk->btk", x, tw) + teacher_bs[None, :, :]
    soft_logits = t_logits.mean(axis=1)
    soft_labels = jax.nn.softmax(t_logits, axis=-1).mean(axis=1)
    return model_out, soft_labels, soft_logits


if __name__ == "__main__":
    # Small shapes consistent with an image-classification wrapper.
    B, C, H, W = 2, 4, 16, 16
    D = C * H * W
    K = 10        # number of classes
    T = 3         # number of teachers (len(self.teachers_0))

    key = jax.random.PRNGKey(0)
    kx, ksw, ksb, ktw, ktb = jax.random.split(key, 5)

    x = jax.random.normal(kx, (B, C, H, W), dtype=jnp.float32)
    student_w = jax.random.normal(ksw, (D, K), dtype=jnp.float32) * 0.02
    student_b = jax.random.normal(ksb, (K,), dtype=jnp.float32) * 0.02
    teacher_ws = jax.random.normal(ktw, (T, D, K), dtype=jnp.float32) * 0.02
    teacher_bs = jax.random.normal(ktb, (T, K), dtype=jnp.float32) * 0.02

    # Pack weights ONCE (parameters), not per forward call.
    packed = pack_distillation_params(student_w, student_b, teacher_ws, teacher_bs)
    jax.block_until_ready(packed.w_fused)

    # Training path (combine=True, before=True).
    model_out, soft_labels, soft_logits = distillation_forward(
        x, packed, training=True, before=True)
    # Eval path (student only).
    eval_out = distillation_forward(x, packed, training=False)
    jax.block_until_ready((model_out, soft_labels, soft_logits, eval_out))

    ref_out, ref_labels, ref_logits = _reference(
        x, student_w, student_b, teacher_ws, teacher_bs)

    assert jnp.allclose(model_out, ref_out, atol=1e-3, rtol=1e-3)
    assert jnp.allclose(soft_labels, ref_labels, atol=1e-3, rtol=1e-3)
    assert jnp.allclose(soft_logits, ref_logits, atol=1e-3, rtol=1e-3)
    assert jnp.allclose(eval_out, ref_out, atol=1e-3, rtol=1e-3)

    # TODO(synk): the non-combine branches pick a random teacher via Python's
    # random.randint; that host-side RNG choice stays outside the kernel (one
    # would pass only the chosen teacher's packed params to the student-style
    # kernel).
    print("KERNEL_OK")
</pallas_src>

<mosaic_0001>
module attributes {stable_mosaic.version = 11 : i64} {
  func.func @_distill_fused_kernel(%arg0: i32, %arg1: i32, %arg2: memref<16x512xbf16, #tpu.memory_space<vmem>>, %arg3: memref<512x512xbf16, #tpu.memory_space<vmem>>, %arg4: memref<1x512xf32, #tpu.memory_space<vmem>>, %arg5: memref<16x128xf32, #tpu.memory_space<vmem>>, %arg6: memref<16x128xf32, #tpu.memory_space<vmem>>, %arg7: memref<16x128xf32, #tpu.memory_space<vmem>>, %arg8: memref<16x512xf32, #tpu.memory_space<vmem>>) attributes {dimension_semantics = [#tpu.dimension_semantics<parallel>, #tpu.dimension_semantics<arbitrary>], iteration_bounds = array<i64: 1, 2>, scalar_prefetch = 0 : i64, scratch_operands = 1 : i64, tpu.core_type = #tpu.core_type<tc>, window_params = [{transform_indices = @transform_0, window_bounds = array<i64: 16, 512>}, {transform_indices = @transform_1, window_bounds = array<i64: 512, 512>}, {pipeline_mode = #tpu.pipeline_mode<synchronous>, transform_indices = @transform_2, window_bounds = array<i64: 1, 512>}, {transform_indices = @transform_3, window_bounds = array<i64: 16, 128>}, {transform_indices = @transform_4, window_bounds = array<i64: 16, 128>}, {transform_indices = @transform_5, window_bounds = array<i64: 16, 128>}]} {
    %c0_i32 = arith.constant 0 : i32
    %0 = arith.cmpi eq, %arg1, %c0_i32 : i32
    %1 = arith.extui %0 : i1 to i32
    %c0_i32_0 = arith.constant 0 : i32
    %2 = arith.cmpi ne, %1, %c0_i32_0 : i32
    scf.if %2 {
      %cst_9 = arith.constant 0.000000e+00 : f32
      %12 = vector.broadcast %cst_9 : f32 to vector<16x512xf32>
      %c0_10 = arith.constant 0 : index
      %c0_11 = arith.constant 0 : index
      %13 = vector.load %arg8[%c0_10, %c0_11] : memref<16x512xf32, #tpu.memory_space<vmem>>, vector<16x512xf32>
      tpu.vector_store %arg8[%c0_10, %c0_11], %12 {strides = array<i32>} : memref<16x512xf32, #tpu.memory_space<vmem>>, vector<16x512xf32>,
    } else {
    }
    %c0 = arith.constant 0 : index
    %c0_1 = arith.constant 0 : index
    %3 = vector.load %arg8[%c0, %c0_1] : memref<16x512xf32, #tpu.memory_space<vmem>>, vector<16x512xf32>
    %c0_2 = arith.constant 0 : index
    %c0_3 = arith.constant 0 : index
    %4 = vector.load %arg2[%c0_2, %c0_3] : memref<16x512xbf16, #tpu.memory_space<vmem>>, vector<16x512xbf16>
    %c0_4 = arith.constant 0 : index
    %c0_5 = arith.constant 0 : index
    %5 = vector.load %arg3[%c0_4, %c0_5] : memref<512x512xbf16, #tpu.memory_space<vmem>>, vector<512x512xbf16>
    %cst = arith.constant dense<0.000000e+00> : vector<16x512xf32>
    %6 = tpu.matmul %4, %5, %cst {dimension_numbers = #tpu.dot_dimension_numbers<[1], [0], [0], [1], [0, 0, 1, 1], [], []>} : vector<16x512xbf16>, vector<512x512xbf16>, vector<16x512xf32> -> vector<16x512xf32>
    %7 = arith.addf %3, %6 : vector<16x512xf32>
    %c0_6 = arith.constant 0 : index
    %c0_7 = arith.constant 0 : index
    %8 = vector.load %arg8[%c0_6, %c0_7] : memref<16x512xf32, #tpu.memory_space<vmem>>, vector<16x512xf32>
    tpu.vector_store %arg8[%c0_6, %c0_7], %7 {strides = array<i32>} : memref<16x512xf32, #tpu.memory_space<vmem>>, vector<16x512xf32>,
    %c1_i32 = arith.constant 1 : i32
    %9 = arith.cmpi eq, %arg1, %c1_i32 : i32
    %10 = arith.extui %9 : i1 to i32
    %c0_i32_8 = arith.constant 0 : i32
    %11 = arith.cmpi ne, %10, %c0_i32_8 : i32
    scf.if %11 {
      %c0_9 = arith.constant 0 : index
      %c384 = arith.constant 384 : index
      %12 = vector.load %arg8[%c0_9, %c384] : memref<16x512xf32, #tpu.memory_space<vmem>>, vector<16x128xf32>
      %c0_10 = arith.constant 0 : index
      %c384_11 = arith.constant 384 : index
      %13 = vector.load %arg4[%c0_10, %c384_11] : memref<1x512xf32, #tpu.memory_space<vmem>>, vector<1x128xf32>
      %14 = vector.broadcast %13 : vector<1x128xf32> to vector<16x128xf32>
      %15 = arith.addf %12, %14 : vector<16x128xf32>
      %c0_12 = arith.constant 0 : index
      %c0_13 = arith.constant 0 : index
      %16 = vector.load %arg5[%c0_12, %c0_13] : memref<16x128xf32, #tpu.memory_space<vmem>>, vector<16x128xf32>
      tpu.vector_store %arg5[%c0_12, %c0_13], %15 {strides = array<i32>} : memref<16x128xf32, #tpu.memory_space<vmem>>, vector<16x128xf32>,
      %cst_14 = arith.constant 0.000000e+00 : f32
      %17 = vector.broadcast %cst_14 : f32 to vector<16x128xf32>
      %cst_15 = arith.constant 0.000000e+00 : f32
      %18 = vector.broadcast %cst_15 : f32 to vector<16x128xf32>
      %c0_16 = arith.constant 0 : index
      %c0_17 = arith.constant 0 : index
      %19 = vector.load %arg8[%c0_16, %c0_17] : memref<16x512xf32, #tpu.memory_space<vmem>>, vector<16x128xf32>
      %c0_18 = arith.constant 0 : index
      %c0_19 = arith.constant 0 : index
      %20 = vector.load %arg4[%c0_18, %c0_19] : memref<1x512xf32, #tpu.memory_space<vmem>>, vector<1x128xf32>
      %21 = vector.broadcast %20 : vector<1x128xf32> to vector<16x128xf32>
      %22 = arith.addf %19, %21 : vector<16x128xf32>
      %cst_20 = arith.constant dense<0xFF800000> : vector<16xf32>
      %23 = vector.multi_reduction <maximumf>, %22, %cst_20 [1] : vector<16x128xf32> to vector<16xf32>
      %24 = vector.shape_cast %23 : vector<16xf32> to vector<16x1xf32>
      %25 = vector.broadcast %24 : vector<16x1xf32> to vector<16x128xf32>
      %26 = arith.subf %22, %25 : vector<16x128xf32>
      %27 = math.exp %26 : vector<16x128xf32>
      %cst_21 = arith.constant dense<0.000000e+00> : vector<16xf32>
      %28 = vector.multi_reduction <add>, %27, %cst_21 [1] : vector<16x128xf32> to vector<16xf32>
      %29 = vector.shape_cast %28 : vector<16xf32> to vector<16x1xf32>
      %30 = tpu.reciprocal %29 {approx = true} : vector<16x1xf32> -> vector<16x1xf32>
      %31 = vector.broadcast %30 : vector<16x1xf32> to vector<16x128xf32>
      %32 = arith.mulf %27, %31 : vector<16x128xf32>
      %33 = arith.addf %17, %32 : vector<16x128xf32>
      %34 = arith.addf %18, %22 : vector<16x128xf32>
      %c0_22 = arith.constant 0 : index
      %c128 = arith.constant 128 : index
      %35 = vector.load %arg8[%c0_22, %c128] : memref<16x512xf32, #tpu.memory_space<vmem>>, vector<16x128xf32>
      %c0_23 = arith.constant 0 : index
      %c128_24 = arith.constant 128 : index
      %36 = vector.load %arg4[%c0_23, %c128_24] : memref<1x512xf32, #tpu.memory_space<vmem>>, vector<1x128xf32>
      %37 = vector.broadcast %36 : vector<1x128xf32> to vector<16x128xf32>
      %38 = arith.addf %35, %37 : vector<16x128xf32>
      %cst_25 = arith.constant dense<0xFF800000> : vector<16xf32>
      %39 = vector.multi_reduction <maximumf>, %38, %cst_25 [1] : vector<16x128xf32> to vector<16xf32>
      %40 = vector.shape_cast %39 : vector<16xf32> to vector<16x1xf32>
      %41 = vector.broadcast %40 : vector<16x1xf32> to vector<16x128xf32>
      %42 = arith.subf %38, %41 : vector<16x128xf32>
      %43 = math.exp %42 : vector<16x128xf32>
      %cst_26 = arith.constant dense<0.000000e+00> : vector<16xf32>
      %44 = vector.multi_reduction <add>, %43, %cst_26 [1] : vector<16x128xf32> to vector<16xf32>
      %45 = vector.shape_cast %44 : vector<16xf32> to vector<16x1xf32>
      %46 = tpu.reciprocal %45 {approx = true} : vector<16x1xf32> -> vector<16x1xf32>
      %47 = vector.broadcast %46 : vector<16x1xf32> to vector<16x128xf32>
      %48 = arith.mulf %43, %47 : vector<16x128xf32>
      %49 = arith.addf %33, %48 : vector<16x128xf32>
      %50 = arith.addf %34, %38 : vector<16x128xf32>
      %c0_27 = arith.constant 0 : index
      %c256 = arith.constant 256 : index
      %51 = vector.load %arg8[%c0_27, %c256] : memref<16x512xf32, #tpu.memory_space<vmem>>, vector<16x128xf32>
      %c0_28 = arith.constant 0 : index
      %c256_29 = arith.constant 256 : index
      %52 = vector.load %arg4[%c0_28, %c256_29] : memref<1x512xf32, #tpu.memory_space<vmem>>, vector<1x128xf32>
      %53 = vector.broadcast %52 : vector<1x128xf32> to vector<16x128xf32>
      %54 = arith.addf %51, %53 : vector<16x128xf32>
      %cst_30 = arith.constant dense<0xFF800000> : vector<16xf32>
      %55 = vector.multi_reduction <maximumf>, %54, %cst_30 [1] : vector<16x128xf32> to vector<16xf32>
      %56 = vector.shape_cast %55 : vector<16xf32> to vector<16x1xf32>
      %57 = vector.broadcast %56 : vector<16x1xf32> to vector<16x128xf32>
      %58 = arith.subf %54, %57 : vector<16x128xf32>
      %59 = math.exp %58 : vector<16x128xf32>
      %cst_31 = arith.constant dense<0.000000e+00> : vector<16xf32>
      %60 = vector.multi_reduction <add>, %59, %cst_31 [1] : vector<16x128xf32> to vector<16xf32>
      %61 = vector.shape_cast %60 : vector<16xf32> to vector<16x1xf32>
      %62 = tpu.reciprocal %61 {approx = true} : vector<16x1xf32> -> vector<16x1xf32>
      %63 = vector.broadcast %62 : vector<16x1xf32> to vector<16x128xf32>
      %64 = arith.mulf %59, %63 : vector<16x128xf32>
      %65 = arith.addf %49, %64 : vector<16x128xf32>
      %66 = arith.addf %50, %54 : vector<16x128xf32>
      %cst_32 = arith.constant 0.333333343 : f32
      %67 = vector.broadcast %cst_32 : f32 to vector<16x128xf32>
      %68 = arith.mulf %65, %67 : vector<16x128xf32>
      %c0_33 = arith.constant 0 : index
      %c0_34 = arith.constant 0 : index
      %69 = vector.load %arg6[%c0_33, %c0_34] : memref<16x128xf32, #tpu.memory_space<vmem>>, vector<16x128xf32>
      tpu.vector_store %arg6[%c0_33, %c0_34], %68 {strides = array<i32>} : memref<16x128xf32, #tpu.memory_space<vmem>>, vector<16x128xf32>,
      %cst_35 = arith.constant 0.333333343 : f32
      %70 = vector.broadcast %cst_35 : f32 to vector<16x128xf32>
      %71 = arith.mulf %66, %70 : vector<16x128xf32>
      %c0_36 = arith.constant 0 : index
      %c0_37 = arith.constant 0 : index
      %72 = vector.load %arg7[%c0_36, %c0_37] : memref<16x128xf32, #tpu.memory_space<vmem>>, vector<16x128xf32>
      tpu.vector_store %arg7[%c0_36, %c0_37], %71 {strides = array<i32>} : memref<16x128xf32, #tpu.memory_space<vmem>>, vector<16x128xf32>,
    } else {
    }
    return
  }
  func.func @transform_0(%arg0: i32, %arg1: i32) -> (i32, i32) {
    %c0_i32 = arith.constant 0 : i32
    return %arg0, %arg1 : i32, i32
  }
  func.func @transform_1(%arg0: i32, %arg1: i32) -> (i32, i32) {
    %c0_i32 = arith.constant 0 : i32
    %c0_i32_0 = arith.constant 0 : i32
    return %arg1, %c0_i32 : i32, i32
  }
  func.func @transform_2(%arg0: i32, %arg1: i32) -> (i32, i32) {
    %c0_i32 = arith.constant 0 : i32
    %c0_i32_0 = arith.constant 0 : i32
    %c0_i32_1 = arith.constant 0 : i32
    return %c0_i32, %c0_i32_0 : i32, i32
  }
  func.func @transform_3(%arg0: i32, %arg1: i32) -> (i32, i32) {
    %c0_i32 = arith.constant 0 : i32
    %c0_i32_0 = arith.constant 0 : i32
    return %arg0, %c0_i32 : i32, i32
  }
  func.func @transform_4(%arg0: i32, %arg1: i32) -> (i32, i32) {
    %c0_i32 = arith.constant 0 : i32
    %c0_i32_0 = arith.constant 0 : i32
    return %arg0, %c0_i32 : i32, i32
  }
  func.func @transform_5(%arg0: i32, %arg1: i32) -> (i32, i32) {
    %c0_i32 = arith.constant 0 : i32
    %c0_i32_0 = arith.constant 0 : i32
    return %arg0, %c0_i32 : i32, i32
  }
}

</mosaic_0001>

<llo_original>
// kernel: tpu_custom_call.1
$region0: #{tpu_custom_call.1}
  #allocation0 [shape = 'u32[]', space=smem, size = 0x4, offset = 0x4, fixed_abs, tag = 'smem constant byte address 0x4 - core index']
  #allocation1 [shape = 'u32[144,128]{1,0:T(1,128)}', space=vmem, size = 0x12000, scoped, tag = 'internal scratch']
  #allocation2 [shape = 'f32[16,512]{1,0:T(8,128)}', space=vmem, size = 0x8000, scoped, tag = 'scratch operand']
  %s0 = inlined_call_operand.hbm [shape: bf16[16,1024], index: 0, kind: input, shape index: {}]
  %s1 = inlined_call_operand.hbm [shape: bf16[1024,512], index: 1, kind: input, shape index: {}]
  %s2 = inlined_call_operand.hbm [shape: f32[1,512], index: 2, kind: input, shape index: {}]
  %s3 = inlined_call_operand.hbm [shape: f32[16,128], index: 3, kind: output, shape index: {0}]
  %s4 = inlined_call_operand.hbm [shape: f32[16,128], index: 4, kind: output, shape index: {1}]
  %s5 = inlined_call_operand.hbm [shape: f32[16,128], index: 5, kind: output, shape index: {2}]
  %6 = xla_tuple %s3, %s4, %s5
  %s7 = sld [smem:[#allocation0]]
  $region81: #{tpu_custom_call.1} parent=0
    _
  %s9 = ssub.s32 1, %s7
  %s10 = scalar_select 0, %s9, %s7
  $region1: #{tpu_custom_call.1} parent=0
    #allocation3 [shape = 'u8[32768]{0}', space=vmem, size = 0x8000, scoped, tag = 'input window, operand 0']
    #allocation4 [shape = 's32[2]{0}', space=sflag, size = 0x8, scoped, tag = 'scoped memory for tpu_custom_call.1']
    #allocation5 [shape = 's32[2]{0}', space=sflag, size = 0x8, scoped, tag = 'scoped memory for tpu_custom_call.1']
    #allocation6 [shape = 'u8[1048576]{0}', space=vmem, size = 0x100000, scoped, tag = 'input window, operand 1']
    #allocation7 [shape = 's32[2]{0}', space=sflag, size = 0x8, scoped, tag = 'scoped memory for tpu_custom_call.1']
    #allocation8 [shape = 'u8[2048]{0}', space=vmem, size = 0x800, scoped, tag = 'input window, operand 2, single buffered']
    #allocation9 [shape = 'u8[8192]{0}', space=vmem, size = 0x2000, scoped, tag = 'output window, operand 0, single buffered']
    #allocation10 [shape = 'u8[8192]{0}', space=vmem, size = 0x2000, scoped, tag = 'output window, operand 1, single buffered']
    #allocation11 [shape = 's32[1]{0}', space=sflag, size = 0x4, scoped, tag = 'scoped memory for tpu_custom_call.1']
    #allocation12 [shape = 'u8[8192]{0}', space=vmem, size = 0x2000, scoped, tag = 'output window, operand 2, single buffered']
    %11 = vsyncpa [#allocation4], 0
    %s12 = scalar_lea.sflag [#allocation4], 1
    %13 = vsyncpa %s12, 0
    %14 = vsyncpa [#allocation7], 0
    %s15 = scalar_lea.sflag [#allocation7], 1
    %16 = vsyncpa %s15, 0
    %17 = vsyncpa [#allocation5], 0
    %18 = vsyncpa [#allocation11], 0
    loop: start=0, step=1, limit=4
    $region2: #{tpu_custom_call.1} parent=1 // loop_pre_header
      _
    $region3: #{tpu_custom_call.1} parent=1 // loop_header
      %s20 = sphi 0, %s24
      %p21 = scmp.ge.s32.totalorder %s20, 4
      %s27 = sphi 0, %s39
      %s28 = sphi 0, %s35
      %s29 = sphi 0, %s27
      %s30 = sphi 0, %s28
      %s31 = sphi 0, %s29
      %s32 = sphi 0, %s30
      %s44 = sphi 0, %s46
      %s47 = sphi 0, %s44
      %s48 = sphi 0, %s47
      %s64 = sphi 0, %s48
      %s70 = sphi 0, %s72
      %s73 = sphi 0, %s70
      %s74 = sphi 0, %s73
      %s90 = sphi 0, %s74
      %s94 = sphi 0, %s94
      %s96 = sphi 0, %s94
      %s97 = sphi 0, %s96
      %s111 = sphi 0, %s97
      %s117 = sphi 0, %s119
      %s120 = sphi 0, %s117
      %s121 = sphi 0, %s120
      %s137 = sphi 0, %s121
      %s143 = sphi 0, %s145
      %s146 = sphi 0, %s143
      %s147 = sphi 0, %s146
      %s163 = sphi 0, %s147
      %s169 = sphi 0, %s171
      %s172 = sphi 0, %s169
      %s173 = sphi 0, %s172
      %s189 = sphi 0, %s173
    $region4: #{tpu_custom_call.1} parent=1 // loop_header_branch
      %23 = sbr.rel (%p21) target = $region8
    $region5: #{tpu_custom_call.1} parent=1 // loop_body
      %s25 = ssub.s32 %s20, 1
      %s26 = ssub.s32 %s20, 2
      %s33 = sadd.s32 1, %s28
      %p34 = scmp.ge.s32.totalorder %s33, 2
      %s35 = scalar_select %p34, 0, %s33
      %s36 = sadd.s32 1, %s27
      %s37 = scalar_select %p34, %s36, %s27
      %p38 = scmp.ge.s32.totalorder %s37, 1
      %s39 = scalar_select %p38, 0, %s37
      %s40 = ssub.s32 %s27, %s39
      %s41 = ssub.s32 %s28, %s35
      %s42 = sor.u32 %s40, %s41
      %p43 = scmp.eq.s32.totalorder %s42, 0
      %s45 = sadd.s32 %s44, 1
      %s46 = scalar_select %p43, %s44, %s45
      %p49 = pneg %p43
      %p50 = scmp.eq.s32.totalorder %s20, 1
      %p51 = por %p49, %p50
      %p52 = scmp.ne.s32.totalorder %s44, %s47
      %p53 = scmp.eq.s32.totalorder %s20, 0
      %p54 = por %p52, %p53
      %p55 = scmp.ne.s32.totalorder %s44, %s47
      %p56 = scmp.eq.s32.totalorder %s25, 1
      %p57 = por %p55, %p56
      %p58 = scmp.ne.s32.totalorder %s47, %s48
      %p59 = scmp.eq.s32.totalorder %s25, 0
      %p60 = por %p58, %p59
      %p61 = scmp.ne.s32.totalorder %s47, %s48
      %p62 = scmp.eq.s32.totalorder %s26, 1
      %p63 = por %p61, %p62
      %p65 = scmp.ne.s32.totalorder %s48, %s64
      %p66 = scmp.eq.s32.totalorder %s26, 0
      %p67 = por %p65, %p66
      %s68 = ssub.s32 %s28, %s35
      %p69 = scmp.eq.s32.totalorder %s68, 0
      %s71 = sadd.s32 %s70, 1
      %s72 = scalar_select %p69, %s70, %s71
      %p75 = pneg %p69
      %p76 = scmp.eq.s32.totalorder %s20, 1
      %p77 = por %p75, %p76
      %p78 = scmp.ne.s32.totalorder %s70, %s73
      %p79 = scmp.eq.s32.totalorder %s20, 0
      %p80 = por %p78, %p79
      %p81 = scmp.ne.s32.totalorder %s70, %s73
      %p82 = scmp.eq.s32.totalorder %s25, 1
      %p83 = por %p81, %p82
      %p84 = scmp.ne.s32.totalorder %s73, %s74
      %p85 = scmp.eq.s32.totalorder %s25, 0
      %p86 = por %p84, %p85
      %p87 = scmp.ne.s32.totalorder %s73, %s74
      %p88 = scmp.eq.s32.totalorder %s26, 1
      %p89 = por %p87, %p88
      %p91 = scmp.ne.s32.totalorder %s74, %s90
      %p92 = scmp.eq.s32.totalorder %s26, 0
      %p93 = por %p91, %p92
      %s95 = sadd.s32 %s94, 1
      %p98 = scmp.eq.s32.totalorder %s20, 1
      %p99 = scmp.ne.s32.totalorder %s94, %s96
      %p100 = scmp.eq.s32.totalorder %s20, 0
      %p101 = por %p99, %p100
      %p102 = scmp.ne.s32.totalorder %s94, %s96
      %p103 = scmp.eq.s32.totalorder %s25, 1
      %p104 = por %p102, %p103
      %p105 = scmp.ne.s32.totalorder %s96, %s97
      %p106 = scmp.eq.s32.totalorder %s25, 0
      %p107 = por %p105, %p106
      %p108 = scmp.ne.s32.totalorder %s96, %s97
      %p109 = scmp.eq.s32.totalorder %s26, 1
      %p110 = por %p108, %p109
      %p112 = scmp.ne.s32.totalorder %s97, %s111
      %p113 = scmp.eq.s32.totalorder %s26, 0
      %p114 = por %p112, %p113
      %s115 = ssub.s32 %s27, %s39
      %p116 = scmp.eq.s32.totalorder %s115, 0
      %s118 = sadd.s32 %s117, 1
      %s119 = scalar_select %p116, %s117, %s118
      %p122 = pneg %p116
      %p123 = scmp.eq.s32.totalorder %s20, 1
      %p124 = por %p122, %p123
      %p125 = scmp.ne.s32.totalorder %s117, %s120
      %p126 = scmp.eq.s32.totalorder %s20, 0
      %p127 = por %p125, %p126
      %p128 = scmp.ne.s32.totalorder %s117, %s120
      %p129 = scmp.eq.s32.totalorder %s25, 1
      %p130 = por %p128, %p129
      %p131 = scmp.ne.s32.totalorder %s120, %s121
      %p132 = scmp.eq.s32.totalorder %s25, 0
      %p133 = por %p131, %p132
      %p134 = scmp.ne.s32.totalorder %s120, %s121
      %p135 = scmp.eq.s32.totalorder %s26, 1
      %p136 = por %p134, %p135
      %p138 = scmp.ne.s32.totalorder %s121, %s137
      %p139 = scmp.eq.s32.totalorder %s26, 0
      %p140 = por %p138, %p139
      %s141 = ssub.s32 %s27, %s39
      %p142 = scmp.eq.s32.totalorder %s141, 0
      %s144 = sadd.s32 %s143, 1
      %s145 = scalar_select %p142, %s143, %s144
      %p148 = pneg %p142
      %p149 = scmp.eq.s32.totalorder %s20, 1
      %p150 = por %p148, %p149
      %p151 = scmp.ne.s32.totalorder %s143, %s146
      %p152 = scmp.eq.s32.totalorder %s20, 0
      %p153 = por %p151, %p152
      %p154 = scmp.ne.s32.totalorder %s143, %s146
      %p155 = scmp.eq.s32.totalorder %s25, 1
      %p156 = por %p154, %p155
      %p157 = scmp.ne.s32.totalorder %s146, %s147
      %p158 = scmp.eq.s32.totalorder %s25, 0
      %p159 = por %p157, %p158
      %p160 = scmp.ne.s32.totalorder %s146, %s147
      %p161 = scmp.eq.s32.totalorder %s26, 1
      %p162 = por %p160, %p161
      %p164 = scmp.ne.s32.totalorder %s147, %s163
      %p165 = scmp.eq.s32.totalorder %s26, 0
      %p166 = por %p164, %p165
      %s167 = ssub.s32 %s27, %s39
      %p168 = scmp.eq.s32.totalorder %s167, 0
      %s170 = sadd.s32 %s169, 1
      %s171 = scalar_select %p168, %s169, %s170
      %p174 = pneg %p168
      %p175 = scmp.eq.s32.totalorder %s20, 1
      %p176 = por %p174, %p175
      %p177 = scmp.ne.s32.totalorder %s169, %s172
      %p178 = scmp.eq.s32.totalorder %s20, 0
      %p179 = por %p177, %p178
      %p180 = scmp.ne.s32.totalorder %s169, %s172
      %p181 = scmp.eq.s32.totalorder %s25, 1
      %p182 = por %p180, %p181
      %p183 = scmp.ne.s32.totalorder %s172, %s173
      %p184 = scmp.eq.s32.totalorder %s25, 0
      %p185 = por %p183, %p184
      %p186 = scmp.ne.s32.totalorder %s172, %s173
      %p187 = scmp.eq.s32.totalorder %s26, 1
      %p188 = por %p186, %p187
      %p190 = scmp.ne.s32.totalorder %s173, %s189
      %p191 = scmp.eq.s32.totalorder %s26, 0
      %p192 = por %p190, %p191
      %p193 = scmp.le.s32.totalorder 1, %s20
      %p194 = scmp.lt.s32.totalorder %s20, 3
      %p195 = pnand %p193, %p194
      %p196 = pneg %p195
      // Predicated region
      $region9: #{tpu_custom_call.1} parent=5 // pred_check
        _
      $region10: #{tpu_custom_call.1} parent=5 // pred_check_branch
        %198 = sbr.rel (%p195) target = $region12
      $region11: #{tpu_custom_call.1} parent=5 // pred_region
        %s199 = ssub.s32 %s20, 1
        // Predicated region
        $region13: #{tpu_custom_call.1} parent=11 // pred_check
          %p200 = pneg %p107
        $region14: #{tpu_custom_call.1} parent=11 // pred_check_branch
          %202 = sbr.rel (%p200) target = $region16
        $region15: #{tpu_custom_call.1} parent=11 // pred_region
          %s204 = ssub.s32 64, 64
          %205 = vsyncadd [#allocation7], %s204
          %s207 = sshll.u32 [#allocation8], 4
          %s208 = int_to_ptr.vmem [resolvable:$true] %s207
          %210 = dma.hbm_to_vmem [thread:$0]  %s2, 64, %s208, [#allocation7]
        $region16: #{tpu_custom_call.1} parent=11 // pred_fallthru
          _
      $region12: #{tpu_custom_call.1} parent=5 // pred_fallthru
        _
      %p211 = scmp.lt.s32.totalorder %s20, 2
      // Predicated region
      $region17: #{tpu_custom_call.1} parent=5 // pred_check
        %p212 = pneg %p211
      $region18: #{tpu_custom_call.1} parent=5 // pred_check_branch
        %214 = sbr.rel (%p212) target = $region20
      $region19: #{tpu_custom_call.1} parent=5 // pred_region
        // Predicated region
        $region21: #{tpu_custom_call.1} parent=19 // pred_check
          %p215 = pneg %p54
        $region22: #{tpu_custom_call.1} parent=19 // pred_check_branch
          %217 = sbr.rel (%p215) target = $region24
        $region23: #{tpu_custom_call.1} parent=19 // pred_region
          %s218 = sand.u32 %s44, 1
          %s219 = scalar_lea.sflag [#allocation4], %s218
          %s220 = sand.u32 %s44, 1
          %s221 = smul.addr %s220, 32
          %s222 = scalar_lea.vmem [#allocation3], %s221
          %s223 = smul.u32 2, %s27
          %s224 = smul.u32 4, %s28
          %s226 = ssub.s32 512, 512
          %227 = vsyncadd %s219, %s226
          %s228 = smul.addr %s223, 8
          %s229 = sadd.s32 %s224, %s228
          %s230 = smul.addr %s229, 64
          %s231 = scalar_lea.hbm %s0, %s230
          %s232 = sshll.u32 %s222, 4
          %s233 = int_to_ptr.vmem [resolvable:$true] %s232
          %238 = dma.hbm_to_vmem [thread:$0]  %s231, 512, %s233, %s219, 512, 256, 16
        $region24: #{tpu_custom_call.1} parent=19 // pred_fallthru
          _
        // Predicated region
        $region25: #{tpu_custom_call.1} parent=19 // pred_check
          %p239 = pneg %p80
        $region26: #{tpu_custom_call.1} parent=19 // pred_check_branch
          %241 = sbr.rel (%p239) target = $region28
        $region27: #{tpu_custom_call.1} parent=19 // pred_region
          %s242 = sand.u32 %s20, 1
          %s243 = scalar_lea.sflag [#allocation7], %s242
          %s244 = sand.u32 %s70, 1
          %s245 = smul.addr %s244, 1024
          %s246 = scalar_lea.vmem [#allocation6], %s245
          %s247 = smul.u32 64, %s28
          %s249 = ssub.s32 16384, 16384
          %250 = vsyncadd %s243, %s249
          %s251 = smul.addr %s247, 4
          %s252 = smul.addr %s251, 64
          %s253 = scalar_lea.hbm %s1, %s252
          %s254 = sshll.u32 %s246, 4
          %s255 = int_to_ptr.vmem [resolvable:$true] %s254
          %260 = dma.hbm_to_vmem [thread:$0]  %s253, 16384, %s255, %s243, 256, 256, 16
        $region28: #{tpu_custom_call.1} parent=19 // pred_fallthru
          _
      $region20: #{tpu_custom_call.1} parent=5 // pred_fallthru
        _
      %p261 = scmp.le.s32.totalorder 1, %s20
      %p262 = scmp.lt.s32.totalorder %s20, 3
      %p263 = pnand %p261, %p262
      %p264 = pneg %p263
      // Predicated region
      $region29: #{tpu_custom_call.1} parent=5 // pred_check
        _
      $region30: #{tpu_custom_call.1} parent=5 // pred_check_branch
        %266 = sbr.rel (%p263) target = $region32
      $region31: #{tpu_custom_call.1} parent=5 // pred_region
        %s267 = ssub.s32 %s20, 1
        %s268 = sand.u32 %s47, 1
        %s269 = scalar_lea.sflag [#allocation4], %s268
        %s270 = sand.u32 %s47, 1
        %s271 = smul.addr %s270, 32
        %s272 = scalar_lea.vmem [#allocation3], %s271
        // Predicated region
        $region33: #{tpu_custom_call.1} parent=31 // pred_check
          %p273 = pneg %p60
        $region34: #{tpu_custom_call.1} parent=31 // pred_check_branch
          %275 = sbr.rel (%p273) target = $region36
        $region35: #{tpu_custom_call.1} parent=31 // pred_region
          %276 = dma.done %s269, 512
        $region36: #{tpu_custom_call.1} parent=31 // pred_fallthru
          _
        %s277 = sand.u32 %s25, 1
        %s278 = scalar_lea.sflag [#allocation7], %s277
        %s279 = sand.u32 %s73, 1
        %s280 = smul.addr %s279, 1024
        %s281 = scalar_lea.vmem [#allocation6], %s280
        // Predicated region
        $region37: #{tpu_custom_call.1} parent=31 // pred_check
          %p282 = pneg %p86
        $region38: #{tpu_custom_call.1} parent=31 // pred_check_branch
          %284 = sbr.rel (%p282) target = $region40
        $region39: #{tpu_custom_call.1} parent=31 // pred_region
          %285 = dma.done %s278, 16384
        $region40: #{tpu_custom_call.1} parent=31 // pred_fallthru
          _
        // Predicated region
        $region41: #{tpu_custom_call.1} parent=31 // pred_check
          %p286 = pneg %p107
        $region42: #{tpu_custom_call.1} parent=31 // pred_check_branch
          %288 = sbr.rel (%p286) target = $region44
        $region43: #{tpu_custom_call.1} parent=31 // pred_region
          %289 = dma.done [#allocation7], 64
        $region44: #{tpu_custom_call.1} parent=31 // pred_fallthru
          _
        %s290 = sand.u32 %s47, 1
        %s291 = scalar_lea.sflag [#allocation4], %s290
        %s292 = sand.u32 %s47, 1
        %s293 = smul.addr %s292, 32
        %s294 = scalar_lea.vmem [#allocation3], %s293
        %p295 = pneg %p60
        %p296 = pneg %p57
        %s297 = sand.u32 %s25, 1
        %s298 = scalar_lea.sflag [#allocation7], %s297
        %s299 = sand.u32 %s73, 1
        %s300 = smul.addr %s299, 1024
        %s301 = scalar_lea.vmem [#allocation6], %s300
        %p302 = pneg %p86
        %p303 = pneg %p83
        %p304 = pneg %p107
        %p305 = pneg %p104
        %p306 = pneg %p133
        %p307 = pneg %p130
        %p308 = pneg %p159
        %p309 = pneg %p156
        %p310 = pneg %p185
        %p311 = pneg %p182
        %s312 = smul.u32 2, %s29
        %s313 = smul.u32 4, %s30
        %s314 = smul.u32 64, %s30
        %s315 = smul.u32 2, %s29
        %s316 = smul.u32 2, %s29
        %s317 = smul.u32 2, %s29
        %p318 = scmp.eq.s32.totalorder %s30, 0
        // Predicated region
        $region45: #{tpu_custom_call.1} parent=31 // pred_check
          %p319 = pneg %p318
        $region46: #{tpu_custom_call.1} parent=31 // pred_check_branch
          %321 = sbr.rel (%p319) target = $region48
        $region47: #{tpu_custom_call.1} parent=31 // pred_region
          %322 = vst [vmem:[#allocation2] sm:$0xff] 0.0
          %323 = vst [vmem:[#allocation2 + $0x8] sm:$0xff] 0.0
          %324 = vst [vmem:[#allocation2 + $0x10] sm:$0xff] 0.0
          %325 = vst [vmem:[#allocation2 + $0x18] sm:$0xff] 0.0
          %326 = vst [vmem:[#allocation2 + $0x20] sm:$0xff] 0.0
          %327 = vst [vmem:[#allocation2 + $0x28] sm:$0xff] 0.0
          %328 = vst [vmem:[#allocation2 + $0x30] sm:$0xff] 0.0
          %329 = vst [vmem:[#allocation2 + $0x38] sm:$0xff] 0.0
        $region48: #{tpu_custom_call.1} parent=31 // pred_fallthru
          _
        %v330 = vld [vmem:[#allocation2] sm:$0xff]
        %v331 = vld [vmem:[#allocation2 + $0x8] sm:$0xff]
        %v332 = vld [vmem:[#allocation2 + $0x10] sm:$0xff]
        %v333 = vld [vmem:[#allocation2 + $0x18] sm:$0xff]
        %v334 = vld [vmem:[#allocation2 + $0x20] sm:$0xff]
        %v335 = vld [vmem:[#allocation2 + $0x28] sm:$0xff]
        %v336 = vld [vmem:[#allocation2 + $0x30] sm:$0xff]
        %v337 = vld [vmem:[#allocation2 + $0x38] sm:$0xff]
        %v338 = vld [vmem:[%s272] sm:$0xff]
        %v339 = vld [vmem:[%s272 + $0x8] sm:$0xff]
        %v340 = vld [vmem:[%s272 + $0x10] sm:$0xff]
        %v341 = vld [vmem:[%s272 + $0x18] sm:$0xff]
        %v342 = vld [vmem:[%s281] sm:$0xff]
        %v343 = vld [vmem:[%s281 + $0x8] sm:$0xff]
        %v344 = vld [vmem:[%s281 + $0x10] sm:$0xff]
        %v345 = vld [vmem:[%s281 + $0x18] sm:$0xff]
        %v346 = vld [vmem:[%s281 + $0x20] sm:$0xff]
        %v347 = vld [vmem:[%s281 + $0x28] sm:$0xff]
        %v348 = vld [vmem:[%s281 + $0x30] sm:$0xff]
        %v349 = vld [vmem:[%s281 + $0x38] sm:$0xff]
        %v350 = vld [vmem:[%s281 + $0x40] sm:$0xff]
        %v351 = vld [vmem:[%s281 + $0x48] sm:$0xff]
        %v352 = vld [vmem:[%s281 + $0x50] sm:$0xff]
        %v353 = vld [vmem:[%s281 + $0x58] sm:$0xff]
        %v354 = vld [vmem:[%s281 + $0x60] sm:$0xff]
        %v355 = vld [vmem:[%s281 + $0x68] sm:$0xff]
        %v356 = vld [vmem:[%s281 + $0x70] sm:$0xff]
        %v357 = vld [vmem:[%s281 + $0x78] sm:$0xff]
        %v358 = vld [vmem:[%s281 + $0x80] sm:$0xff]
        %v359 = vld [vmem:[%s281 + $0x88] sm:$0xff]
        %v360 = vld [vmem:[%s281 + $0x90] sm:$0xff]
        %v361 = vld [vmem:[%s281 + $0x98] sm:$0xff]
        %v362 = vld [vmem:[%s281 + $0xa0] sm:$0xff]
        %v363 = vld [vmem:[%s281 + $0xa8] sm:$0xff]
        %v364 = vld [vmem:[%s281 + $0xb0] sm:$0xff]
        %v365 = vld [vmem:[%s281 + $0xb8] sm:$0xff]
        %v366 = vld [vmem:[%s281 + $0xc0] sm:$0xff]
        %v367 = vld [vmem:[%s281 + $0xc8] sm:$0xff]
        %v368 = vld [vmem:[%s281 + $0xd0] sm:$0xff]
        %v369 = vld [vmem:[%s281 + $0xd8] sm:$0xff]
        %v370 = vld [vmem:[%s281 + $0xe0] sm:$0xff]
        %v371 = vld [vmem:[%s281 + $0xe8] sm:$0xff]
        %v372 = vld [vmem:[%s281 + $0xf0] sm:$0xff]
        %v373 = vld [vmem:[%s281 + $0xf8] sm:$0xff]
        %v374 = vld [vmem:[%s281 + $0x100] sm:$0xff]
        %v375 = vld [vmem:[%s281 + $0x108] sm:$0xff]
        %v376 = vld [vmem:[%s281 + $0x110] sm:$0xff]
        %v377 = vld [vmem:[%s281 + $0x118] sm:$0xff]
        %v378 = vld [vmem:[%s281 + $0x120] sm:$0xff]
        %v379 = vld [vmem:[%s281 + $0x128] sm:$0xff]
        %v380 = vld [vmem:[%s281 + $0x130] sm:$0xff]
        %v381 = vld [vmem:[%s281 + $0x138] sm:$0xff]
        %v382 = vld [vmem:[%s281 + $0x140] sm:$0xff]
        %v383 = vld [vmem:[%s281 + $0x148] sm:$0xff]
        %v384 = vld [vmem:[%s281 + $0x150] sm:$0xff]
        %v385 = vld [vmem:[%s281 + $0x158] sm:$0xff]
        %v386 = vld [vmem:[%s281 + $0x160] sm:$0xff]
        %v387 = vld [vmem:[%s281 + $0x168] sm:$0xff]
        %v388 = vld [vmem:[%s281 + $0x170] sm:$0xff]
        %v389 = vld [vmem:[%s281 + $0x178] sm:$0xff]
        %v390 = vld [vmem:[%s281 + $0x180] sm:$0xff]
        %v391 = vld [vmem:[%s281 + $0x188] sm:$0xff]
        %v392 = vld [vmem:[%s281 + $0x190] sm:$0xff]
        %v393 = vld [vmem:[%s281 + $0x198] sm:$0xff]
        %v394 = vld [vmem:[%s281 + $0x1a0] sm:$0xff]
        %v395 = vld [vmem:[%s281 + $0x1a8] sm:$0xff]
        %v396 = vld [vmem:[%s281 + $0x1b0] sm:$0xff]
        %v397 = vld [vmem:[%s281 + $0x1b8] sm:$0xff]
        %v398 = vld [vmem:[%s281 + $0x1c0] sm:$0xff]
        %v399 = vld [vmem:[%s281 + $0x1c8] sm:$0xff]
        %v400 = vld [vmem:[%s281 + $0x1d0] sm:$0xff]
        %v401 = vld [vmem:[%s281 + $0x1d8] sm:$0xff]
        %v402 = vld [vmem:[%s281 + $0x1e0] sm:$0xff]
        %v403 = vld [vmem:[%s281 + $0x1e8] sm:$0xff]
        %v404 = vld [vmem:[%s281 + $0x1f0] sm:$0xff]
        %v405 = vld [vmem:[%s281 + $0x1f8] sm:$0xff]
        %v406 = vld [vmem:[%s281 + $0x200] sm:$0xff]
        %v407 = vld [vmem:[%s281 + $0x208] sm:$0xff]
        %v408 = vld [vmem:[%s281 + $0x210] sm:$0xff]
        %v409 = vld [vmem:[%s281 + $0x218] sm:$0xff]
        %v410 = vld [vmem:[%s281 + $0x220] sm:$0xff]
        %v411 = vld [vmem:[%s281 + $0x228] sm:$0xff]
        %v412 = vld [vmem:[%s281 + $0x230] sm:$0xff]
        %v413 = vld [vmem:[%s281 + $0x238] sm:$0xff]
        %v414 = vld [vmem:[%s281 + $0x240] sm:$0xff]
        %v415 = vld [vmem:[%s281 + $0x248] sm:$0xff]
        %v416 = vld [vmem:[%s281 + $0x250] sm:$0xff]
        %v417 = vld [vmem:[%s281 + $0x258] sm:$0xff]
        %v418 = vld [vmem:[%s281 + $0x260] sm:$0xff]
        %v419 = vld [vmem:[%s281 + $0x268] sm:$0xff]
        %v420 = vld [vmem:[%s281 + $0x270] sm:$0xff]
        %v421 = vld [vmem:[%s281 + $0x278] sm:$0xff]
        %v422 = vld [vmem:[%s281 + $0x280] sm:$0xff]
        %v423 = vld [vmem:[%s281 + $0x288] sm:$0xff]
        %v424 = vld [vmem:[%s281 + $0x290] sm:$0xff]
        %v425 = vld [vmem:[%s281 + $0x298] sm:$0xff]
        %v426 = vld [vmem:[%s281 + $0x2a0] sm:$0xff]
        %v427 = vld [vmem:[%s281 + $0x2a8] sm:$0xff]
        %v428 = vld [vmem:[%s281 + $0x2b0] sm:$0xff]
        %v429 = vld [vmem:[%s281 + $0x2b8] sm:$0xff]
        %v430 = vld [vmem:[%s281 + $0x2c0] sm:$0xff]
        %v431 = vld [vmem:[%s281 + $0x2c8] sm:$0xff]
        %v432 = vld [vmem:[%s281 + $0x2d0] sm:$0xff]
        %v433 = vld [vmem:[%s281 + $0x2d8] sm:$0xff]
        %v434 = vld [vmem:[%s281 + $0x2e0] sm:$0xff]
        %v435 = vld [vmem:[%s281 + $0x2e8] sm:$0xff]
        %v436 = vld [vmem:[%s281 + $0x2f0] sm:$0xff]
        %v437 = vld [vmem:[%s281 + $0x2f8] sm:$0xff]
        %v438 = vld [vmem:[%s281 + $0x300] sm:$0xff]
        %v439 = vld [vmem:[%s281 + $0x308] sm:$0xff]
        %v440 = vld [vmem:[%s281 + $0x310] sm:$0xff]
        %v441 = vld [vmem:[%s281 + $0x318] sm:$0xff]
        %v442 = vld [vmem:[%s281 + $0x320] sm:$0xff]
        %v443 = vld [vmem:[%s281 + $0x328] sm:$0xff]
        %v444 = vld [vmem:[%s281 + $0x330] sm:$0xff]
        %v445 = vld [vmem:[%s281 + $0x338] sm:$0xff]
        %v446 = vld [vmem:[%s281 + $0x340] sm:$0xff]
        %v447 = vld [vmem:[%s281 + $0x348] sm:$0xff]
        %v448 = vld [vmem:[%s281 + $0x350] sm:$0xff]
        %v449 = vld [vmem:[%s281 + $0x358] sm:$0xff]
        %v450 = vld [vmem:[%s281 + $0x360] sm:$0xff]
        %v451 = vld [vmem:[%s281 + $0x368] sm:$0xff]
        %v452 = vld [vmem:[%s281 + $0x370] sm:$0xff]
        %v453 = vld [vmem:[%s281 + $0x378] sm:$0xff]
        %v454 = vld [vmem:[%s281 + $0x380] sm:$0xff]
        %v455 = vld [vmem:[%s281 + $0x388] sm:$0xff]
        %v456 = vld [vmem:[%s281 + $0x390] sm:$0xff]
        %v457 = vld [vmem:[%s281 + $0x398] sm:$0xff]
        %v458 = vld [vmem:[%s281 + $0x3a0] sm:$0xff]
        %v459 = vld [vmem:[%s281 + $0x3a8] sm:$0xff]
        %v460 = vld [vmem:[%s281 + $0x3b0] sm:$0xff]
        %v461 = vld [vmem:[%s281 + $0x3b8] sm:$0xff]
        %v462 = vld [vmem:[%s281 + $0x3c0] sm:$0xff]
        %v463 = vld [vmem:[%s281 + $0x3c8] sm:$0xff]
        %v464 = vld [vmem:[%s281 + $0x3d0] sm:$0xff]
        %v465 = vld [vmem:[%s281 + $0x3d8] sm:$0xff]
        %v466 = vld [vmem:[%s281 + $0x3e0] sm:$0xff]
        %v467 = vld [vmem:[%s281 + $0x3e8] sm:$0xff]
        %v468 = vld [vmem:[%s281 + $0x3f0] sm:$0xff]
        %v469 = vld [vmem:[%s281 + $0x3f8] sm:$0xff]
        %v474 = vunpack.c.l.b16 %v338
        %v475 = vunpack.c.h.b16 %v338
        %v476 = vunpack.c.l.b16 %v339
        %v477 = vunpack.c.h.b16 %v339
        %v478 = vunpack.c.l.b16 %v340
        %v479 = vunpack.c.h.b16 %v340
        %v480 = vunpack.c.l.b16 %v341
        %v481 = vunpack.c.h.b16 %v341
        %v482 = vpack.c.b16 %v478, %v474
        %v483 = vpack.c.b16 %v479, %v475
        %v484 = vpack.c.b16 %v480, %v476
        %v485 = vpack.c.b16 %v481, %v477
        %v618 = vunpack.c.l.b16 %v342
        %v619 = vunpack.c.h.b16 %v342
        %v620 = vunpack.c.l.b16 %v343
        %v621 = vunpack.c.h.b16 %v343
        %v622 = vunpack.c.l.b16 %v344
        %v623 = vunpack.c.h.b16 %v344
        %v624 = vunpack.c.l.b16 %v345
        %v625 = vunpack.c.h.b16 %v345
        %v626 = vunpack.c.l.b16 %v346
        %v627 = vunpack.c.h.b16 %v346
        %v628 = vunpack.c.l.b16 %v347
        %v629 = vunpack.c.h.b16 %v347
        %v630 = vunpack.c.l.b16 %v348
        %v631 = vunpack.c.h.b16 %v348
        %v632 = vunpack.c.l.b16 %v349
        %v633 = vunpack.c.h.b16 %v349
        %v634 = vunpack.c.l.b16 %v350
        %v635 = vunpack.c.h.b16 %v350
        %v636 = vunpack.c.l.b16 %v351
        %v637 = vunpack.c.h.b16 %v351
        %v638 = vunpack.c.l.b16 %v352
        %v639 = vunpack.c.h.b16 %v352
        %v640 = vunpack.c.l.b16 %v353
        %v641 = vunpack.c.h.b16 %v353
        %v642 = vunpack.c.l.b16 %v354
        %v643 = vunpack.c.h.b16 %v354
        %v644 = vunpack.c.l.b16 %v355
        %v645 = vunpack.c.h.b16 %v355
        %v646 = vunpack.c.l.b16 %v356
        %v647 = vunpack.c.h.b16 %v356
        %v648 = vunpack.c.l.b16 %v357
        %v649 = vunpack.c.h.b16 %v357
        %v650 = vunpack.c.l.b16 %v358
        %v651 = vunpack.c.h.b16 %v358
        %v652 = vunpack.c.l.b16 %v359
        %v653 = vunpack.c.h.b16 %v359
        %v654 = vunpack.c.l.b16 %v360
        %v655 = vunpack.c.h.b16 %v360
        %v656 = vunpack.c.l.b16 %v361
        %v657 = vunpack.c.h.b16 %v361
        %v658 = vunpack.c.l.b16 %v362
        %v659 = vunpack.c.h.b16 %v362
        %v660 = vunpack.c.l.b16 %v363
        %v661 = vunpack.c.h.b16 %v363
        %v662 = vunpack.c.l.b16 %v364
        %v663 = vunpack.c.h.b16 %v364
        %v664 = vunpack.c.l.b16 %v365
        %v665 = vunpack.c.h.b16 %v365
        %v666 = vunpack.c.l.b16 %v366
        %v667 = vunpack.c.h.b16 %v366
        %v668 = vunpack.c.l.b16 %v367
        %v669 = vunpack.c.h.b16 %v367
        %v670 = vunpack.c.l.b16 %v368
        %v671 = vunpack.c.h.b16 %v368
        %v672 = vunpack.c.l.b16 %v369
        %v673 = vunpack.c.h.b16 %v369
        %v674 = vunpack.c.l.b16 %v370
        %v675 = vunpack.c.h.b16 %v370
        %v676 = vunpack.c.l.b16 %v371
        %v677 = vunpack.c.h.b16 %v371
        %v678 = vunpack.c.l.b16 %v372
        %v679 = vunpack.c.h.b16 %v372
        %v680 = vunpack.c.l.b16 %v373
        %v681 = vunpack.c.h.b16 %v373
        %v682 = vunpack.c.l.b16 %v374
        %v683 = vunpack.c.h.b16 %v374
        %v684 = vunpack.c.l.b16 %v375
        %v685 = vunpack.c.h.b16 %v375
        %v686 = vunpack.c.l.b16 %v376
        %v687 = vunpack.c.h.b16 %v376
        %v688 = vunpack.c.l.b16 %v377
        %v689 = vunpack.c.h.b16 %v377
        %v690 = vunpack.c.l.b16 %v378
        %v691 = vunpack.c.h.b16 %v378
        %v692 = vunpack.c.l.b16 %v379
        %v693 = vunpack.c.h.b16 %v379
        %v694 = vunpack.c.l.b16 %v380
        %v695 = vunpack.c.h.b16 %v380
        %v696 = vunpack.c.l.b16 %v381
        %v697 = vunpack.c.h.b16 %v381
        %v698 = vunpack.c.l.b16 %v382
        %v699 = vunpack.c.h.b16 %v382
        %v700 = vunpack.c.l.b16 %v383
        %v701 = vunpack.c.h.b16 %v383
        %v702 = vunpack.c.l.b16 %v384
        %v703 = vunpack.c.h.b16 %v384
        %v704 = vunpack.c.l.b16 %v385
        %v705 = vunpack.c.h.b16 %v385
        %v706 = vunpack.c.l.b16 %v386
        %v707 = vunpack.c.h.b16 %v386
        %v708 = vunpack.c.l.b16 %v387
        %v709 = vunpack.c.h.b16 %v387
        %v710 = vunpack.c.l.b16 %v388
        %v711 = vunpack.c.h.b16 %v388
        %v712 = vunpack.c.l.b16 %v389
        %v713 = vunpack.c.h.b16 %v389
        %v714 = vunpack.c.l.b16 %v390
        %v715 = vunpack.c.h.b16 %v390
        %v716 = vunpack.c.l.b16 %v391
        %v717 = vunpack.c.h.b16 %v391
        %v718 = vunpack.c.l.b16 %v392
        %v719 = vunpack.c.h.b16 %v392
        %v720 = vunpack.c.l.b16 %v393
        %v721 = vunpack.c.h.b16 %v393
        %v722 = vunpack.c.l.b16 %v394
        %v723 = vunpack.c.h.b16 %v394
        %v724 = vunpack.c.l.b16 %v395
        %v725 = vunpack.c.h.b16 %v395
        %v726 = vunpack.c.l.b16 %v396
        %v727 = vunpack.c.h.b16 %v396
        %v728 = vunpack.c.l.b16 %v397
        %v729 = vunpack.c.h.b16 %v397
        %v730 = vunpack.c.l.b16 %v398
        %v731 = vunpack.c.h.b16 %v398
        %v732 = vunpack.c.l.b16 %v399
        %v733 = vunpack.c.h.b16 %v399
        %v734 = vunpack.c.l.b16 %v400
        %v735 = vunpack.c.h.b16 %v400
        %v736 = vunpack.c.l.b16 %v401
        %v737 = vunpack.c.h.b16 %v401
        %v738 = vunpack.c.l.b16 %v402
        %v739 = vunpack.c.h.b16 %v402
        %v740 = vunpack.c.l.b16 %v403
        %v741 = vunpack.c.h.b16 %v403
        %v742 = vunpack.c.l.b16 %v404
        %v743 = vunpack.c.h.b16 %v404
        %v744 = vunpack.c.l.b16 %v405
        %v745 = vunpack.c.h.b16 %v405
        %v746 = vunpack.c.l.b16 %v406
        %v747 = vunpack.c.h.b16 %v406
        %v748 = vunpack.c.l.b16 %v407
        %v749 = vunpack.c.h.b16 %v407
        %v750 = vunpack.c.l.b16 %v408
        %v751 = vunpack.c.h.b16 %v408
        %v752 = vunpack.c.l.b16 %v409
        %v753 = vunpack.c.h.b16 %v409
        %v754 = vunpack.c.l.b16 %v410
        %v755 = vunpack.c.h.b16 %v410
        %v756 = vunpack.c.l.b16 %v411
        %v757 = vunpack.c.h.b16 %v411
        %v758 = vunpack.c.l.b16 %v412
        %v759 = vunpack.c.h.b16 %v412
        %v760 = vunpack.c.l.b16 %v413
        %v761 = vunpack.c.h.b16 %v413
        %v762 = vunpack.c.l.b16 %v414
        %v763 = vunpack.c.h.b16 %v414
        %v764 = vunpack.c.l.b16 %v415
        %v765 = vunpack.c.h.b16 %v415
        %v766 = vunpack.c.l.b16 %v416
        %v767 = vunpack.c.h.b16 %v416
        %v768 = vunpack.c.l.b16 %v417
        %v769 = vunpack.c.h.b16 %v417
        %v770 = vunpack.c.l.b16 %v418
        %v771 = vunpack.c.h.b16 %v418
        %v772 = vunpack.c.l.b16 %v419
        %v773 = vunpack.c.h.b16 %v419
        %v774 = vunpack.c.l.b16 %v420
        %v775 = vunpack.c.h.b16 %v420
        %v776 = vunpack.c.l.b16 %v421
        %v777 = vunpack.c.h.b16 %v421
        %v778 = vunpack.c.l.b16 %v422
        %v779 = vunpack.c.h.b16 %v422
        %v780 = vunpack.c.l.b16 %v423
        %v781 = vunpack.c.h.b16 %v423
        %v782 = vunpack.c.l.b16 %v424
        %v783 = vunpack.c.h.b16 %v424
        %v784 = vunpack.c.l.b16 %v425
        %v785 = vunpack.c.h.b16 %v425
        %v786 = vunpack.c.l.b16 %v426
        %v787 = vunpack.c.h.b16 %v426
        %v788 = vunpack.c.l.b16 %v427
        %v789 = vunpack.c.h.b16 %v427
        %v790 = vunpack.c.l.b16 %v428
        %v791 = vunpack.c.h.b16 %v428
        %v792 = vunpack.c.l.b16 %v429
        %v793 = vunpack.c.h.b16 %v429
        %v794 = vunpack.c.l.b16 %v430
        %v795 = vunpack.c.h.b16 %v430
        %v796 = vunpack.c.l.b16 %v431
        %v797 = vunpack.c.h.b16 %v431
        %v798 = vunpack.c.l.b16 %v432
        %v799 = vunpack.c.h.b16 %v432
        %v800 = vunpack.c.l.b16 %v433
        %v801 = vunpack.c.h.b16 %v433
        %v802 = vunpack.c.l.b16 %v434
        %v803 = vunpack.c.h.b16 %v434
        %v804 = vunpack.c.l.b16 %v435
        %v805 = vunpack.c.h.b16 %v435
        %v806 = vunpack.c.l.b16 %v436
        %v807 = vunpack.c.h.b16 %v436
        %v808 = vunpack.c.l.b16 %v437
        %v809 = vunpack.c.h.b16 %v437
        %v810 = vunpack.c.l.b16 %v438
        %v811 = vunpack.c.h.b16 %v438
        %v812 = vunpack.c.l.b16 %v439
        %v813 = vunpack.c.h.b16 %v439
        %v814 = vunpack.c.l.b16 %v440
        %v815 = vunpack.c.h.b16 %v440
        %v816 = vunpack.c.l.b16 %v441
        %v817 = vunpack.c.h.b16 %v441
        %v818 = vunpack.c.l.b16 %v442
        %v819 = vunpack.c.h.b16 %v442
        %v820 = vunpack.c.l.b16 %v443
        %v821 = vunpack.c.h.b16 %v443
        %v822 = vunpack.c.l.b16 %v444
        %v823 = vunpack.c.h.b16 %v444
        %v824 = vunpack.c.l.b16 %v445
        %v825 = vunpack.c.h.b16 %v445
        %v826 = vunpack.c.l.b16 %v446
        %v827 = vunpack.c.h.b16 %v446
        %v828 = vunpack.c.l.b16 %v447
        %v829 = vunpack.c.h.b16 %v447
        %v830 = vunpack.c.l.b16 %v448
        %v831 = vunpack.c.h.b16 %v448
        %v832 = vunpack.c.l.b16 %v449
        %v833 = vunpack.c.h.b16 %v449
        %v834 = vunpack.c.l.b16 %v450
        %v835 = vunpack.c.h.b16 %v450
        %v836 = vunpack.c.l.b16 %v451
        %v837 = vunpack.c.h.b16 %v451
        %v838 = vunpack.c.l.b16 %v452
        %v839 = vunpack.c.h.b16 %v452
        %v840 = vunpack.c.l.b16 %v453
        %v841 = vunpack.c.h.b16 %v453
        %v842 = vunpack.c.l.b16 %v454
        %v843 = vunpack.c.h.b16 %v454
        %v844 = vunpack.c.l.b16 %v455
        %v845 = vunpack.c.h.b16 %v455
        %v846 = vunpack.c.l.b16 %v456
        %v847 = vunpack.c.h.b16 %v456
        %v848 = vunpack.c.l.b16 %v457
        %v849 = vunpack.c.h.b16 %v457
        %v850 = vunpack.c.l.b16 %v458
        %v851 = vunpack.c.h.b16 %v458
        %v852 = vunpack.c.l.b16 %v459
        %v853 = vunpack.c.h.b16 %v459
        %v854 = vunpack.c.l.b16 %v460
        %v855 = vunpack.c.h.b16 %v460
        %v856 = vunpack.c.l.b16 %v461
        %v857 = vunpack.c.h.b16 %v461
        %v858 = vunpack.c.l.b16 %v462
        %v859 = vunpack.c.h.b16 %v462
        %v860 = vunpack.c.l.b16 %v463
        %v861 = vunpack.c.h.b16 %v463
        %v862 = vunpack.c.l.b16 %v464
        %v863 = vunpack.c.h.b16 %v464
        %v864 = vunpack.c.l.b16 %v465
        %v865 = vunpack.c.h.b16 %v465
        %v866 = vunpack.c.l.b16 %v466
        %v867 = vunpack.c.h.b16 %v466
        %v868 = vunpack.c.l.b16 %v467
        %v869 = vunpack.c.h.b16 %v467
        %v870 = vunpack.c.l.b16 %v468
        %v871 = vunpack.c.h.b16 %v468
        %v872 = vunpack.c.l.b16 %v469
        %v873 = vunpack.c.h.b16 %v469
        %v874 = vpack.c.b16 %v622, %v618
        %v875 = vpack.c.b16 %v623, %v619
        %v876 = vpack.c.b16 %v624, %v620
        %v877 = vpack.c.b16 %v625, %v621
        %v878 = vpack.c.b16 %v630, %v626
        %v879 = vpack.c.b16 %v631, %v627
        %v880 = vpack.c.b16 %v632, %v628
        %v881 = vpack.c.b16 %v633, %v629
        %v882 = vpack.c.b16 %v638, %v634
        %v883 = vpack.c.b16 %v639, %v635
        %v884 = vpack.c.b16 %v640, %v636
        %v885 = vpack.c.b16 %v641, %v637
        %v886 = vpack.c.b16 %v646, %v642
        %v887 = vpack.c.b16 %v647, %v643
        %v888 = vpack.c.b16 %v648, %v644
        %v889 = vpack.c.b16 %v649, %v645
        %v890 = vpack.c.b16 %v654, %v650
        %v891 = vpack.c.b16 %v655, %v651
        %v892 = vpack.c.b16 %v656, %v652
        %v893 = vpack.c.b16 %v657, %v653
        %v894 = vpack.c.b16 %v662, %v658
        %v895 = vpack.c.b16 %v663, %v659
        %v896 = vpack.c.b16 %v664, %v660
        %v897 = vpack.c.b16 %v665, %v661
        %v898 = vpack.c.b16 %v670, %v666
        %v899 = vpack.c.b16 %v671, %v667
        %v900 = vpack.c.b16 %v672, %v668
        %v901 = vpack.c.b16 %v673, %v669
        %v902 = vpack.c.b16 %v678, %v674
        %v903 = vpack.c.b16 %v679, %v675
        %v904 = vpack.c.b16 %v680, %v676
        %v905 = vpack.c.b16 %v681, %v677
        %v906 = vpack.c.b16 %v686, %v682
        %v907 = vpack.c.b16 %v687, %v683
        %v908 = vpack.c.b16 %v688, %v684
        %v909 = vpack.c.b16 %v689, %v685
        %v910 = vpack.c.b16 %v694, %v690
        %v911 = vpack.c.b16 %v695, %v691
        %v912 = vpack.c.b16 %v696, %v692
        %v913 = vpack.c.b16 %v697, %v693
        %v914 = vpack.c.b16 %v702, %v698
        %v915 = vpack.c.b16 %v703, %v699
        %v916 = vpack.c.b16 %v704, %v700
        %v917 = vpack.c.b16 %v705, %v701
        %v918 = vpack.c.b16 %v710, %v706
        %v919 = vpack.c.b16 %v711, %v707
        %v920 = vpack.c.b16 %v712, %v708
        %v921 = vpack.c.b16 %v713, %v709
        %v922 = vpack.c.b16 %v718, %v714
        %v923 = vpack.c.b16 %v719, %v715
        %v924 = vpack.c.b16 %v720, %v716
        %v925 = vpack.c.b16 %v721, %v717
        %v926 = vpack.c.b16 %v726, %v722
        %v927 = vpack.c.b16 %v727, %v723
        %v928 = vpack.c.b16 %v728, %v724
        %v929 = vpack.c.b16 %v729, %v725
        %v930 = vpack.c.b16 %v734, %v730
        %v931 = vpack.c.b16 %v735, %v731
        %v932 = vpack.c.b16 %v736, %v732
        %v933 = vpack.c.b16 %v737, %v733
        %v934 = vpack.c.b16 %v742, %v738
        %v935 = vpack.c.b16 %v743, %v739
        %v936 = vpack.c.b16 %v744, %v740
        %v937 = vpack.c.b16 %v745, %v741
        %v938 = vpack.c.b16 %v750, %v746
        %v939 = vpack.c.b16 %v751, %v747
        %v940 = vpack.c.b16 %v752, %v748
        %v941 = vpack.c.b16 %v753, %v749
        %v942 = vpack.c.b16 %v758, %v754
        %v943 = vpack.c.b16 %v759, %v755
        %v944 = vpack.c.b16 %v760, %v756
        %v945 = vpack.c.b16 %v761, %v757
        %v946 = vpack.c.b16 %v766, %v762
        %v947 = vpack.c.b16 %v767, %v763
        %v948 = vpack.c.b16 %v768, %v764
        %v949 = vpack.c.b16 %v769, %v765
        %v950 = vpack.c.b16 %v774, %v770
        %v951 = vpack.c.b16 %v775, %v771
        %v952 = vpack.c.b16 %v776, %v772
        %v953 = vpack.c.b16 %v777, %v773
        %v954 = vpack.c.b16 %v782, %v778
        %v955 = vpack.c.b16 %v783, %v779
        %v956 = vpack.c.b16 %v784, %v780
        %v957 = vpack.c.b16 %v785, %v781
        %v958 = vpack.c.b16 %v790, %v786
        %v959 = vpack.c.b16 %v791, %v787
        %v960 = vpack.c.b16 %v792, %v788
        %v961 = vpack.c.b16 %v793, %v789
        %v962 = vpack.c.b16 %v798, %v794
        %v963 = vpack.c.b16 %v799, %v795
        %v964 = vpack.c.b16 %v800, %v796
        %v965 = vpack.c.b16 %v801, %v797
        %v966 = vpack.c.b16 %v806, %v802
        %v967 = vpack.c.b16 %v807, %v803
        %v968 = vpack.c.b16 %v808, %v804
        %v969 = vpack.c.b16 %v809, %v805
        %v970 = vpack.c.b16 %v814, %v810
        %v971 = vpack.c.b16 %v815, %v811
        %v972 = vpack.c.b16 %v816, %v812
        %v973 = vpack.c.b16 %v817, %v813
        %v974 = vpack.c.b16 %v822, %v818
        %v975 = vpack.c.b16 %v823, %v819
        %v976 = vpack.c.b16 %v824, %v820
        %v977 = vpack.c.b16 %v825, %v821
        %v978 = vpack.c.b16 %v830, %v826
        %v979 = vpack.c.b16 %v831, %v827
        %v980 = vpack.c.b16 %v832, %v828
        %v981 = vpack.c.b16 %v833, %v829
        %v982 = vpack.c.b16 %v838, %v834
        %v983 = vpack.c.b16 %v839, %v835
        %v984 = vpack.c.b16 %v840, %v836
        %v985 = vpack.c.b16 %v841, %v837
        %v986 = vpack.c.b16 %v846, %v842
        %v987 = vpack.c.b16 %v847, %v843
        %v988 = vpack.c.b16 %v848, %v844
        %v989 = vpack.c.b16 %v849, %v845
        %v990 = vpack.c.b16 %v854, %v850
        %v991 = vpack.c.b16 %v855, %v851
        %v992 = vpack.c.b16 %v856, %v852
        %v993 = vpack.c.b16 %v857, %v853
        %v994 = vpack.c.b16 %v862, %v858
        %v995 = vpack.c.b16 %v863, %v859
        %v996 = vpack.c.b16 %v864, %v860
        %v997 = vpack.c.b16 %v865, %v861
        %v998 = vpack.c.b16 %v870, %v866
        %v999 = vpack.c.b16 %v871, %v867
        %v1000 = vpack.c.b16 %v872, %v868
        %v1001 = vpack.c.b16 %v873, %v869
        %1130 = vmatprep.subr.bf16.mxu0 %v903
        %1131 = vmatpush1.bf16.msra.mxu0 %v902
        %1132 = vmatprep.subr.bf16.mxu0 %v899
        %1133 = vmatpush1.bf16.msra.mxu0 %v898
        %1134 = vmatprep.subr.bf16.mxu0 %v895
        %1135 = vmatpush1.bf16.msra.mxu0 %v894
        %1136 = vmatprep.subr.bf16.mxu0 %v891
        %1137 = vmatpush1.bf16.msra.mxu0 %v890
        %1138 = vmatprep.subr.bf16.mxu0 %v887
        %1139 = vmatpush1.bf16.msra.mxu0 %v886
        %1140 = vmatprep.subr.bf16.mxu0 %v883
        %1141 = vmatpush1.bf16.msra.mxu0 %v882
        %1142 = vmatprep.subr.bf16.mxu0 %v879
        %1143 = vmatpush1.bf16.msra.mxu0 %v878
        %1144 = vmatprep.subr.bf16.mxu0 %v875
        %1145 = vmatpush1.bf16.msra.mxu0 %v874
        %1146 = vmatprep.subr.bf16.mxu0 %v935
        %1147 = vmatpush2.bf16.msra.mxu0 %v934
        %1148 = vmatprep.subr.bf16.mxu0 %v931
        %1149 = vmatpush2.bf16.msra.mxu0 %v930
        %1150 = vmatprep.subr.bf16.mxu0 %v927
        %1151 = vmatpush2.bf16.msra.mxu0 %v926
        %1152 = vmatprep.subr.bf16.mxu0 %v923
        %1153 = vmatpush2.bf16.msra.mxu0 %v922
        %1154 = vmatprep.subr.bf16.mxu0 %v919
        %1155 = vmatpush2.bf16.msra.mxu0 %v918
        %1156 = vmatprep.subr.bf16.mxu0 %v915
        %1157 = vmatpush2.bf16.msra.mxu0 %v914
        %1158 = vmatprep.subr.bf16.mxu0 %v911
        %1159 = vmatpush2.bf16.msra.mxu0 %v910
        %1160 = vmatprep.subr.bf16.mxu0 %v907
        %1161 = vmatpush2.bf16.msra.mxu0 %v906
        %1162 = vmatprep.mubr.bf16.mxu0 %v483
        %1163 = vmatmul.mubr.bf16.gmra.mxu0 %v482
        %v1164 = vpop.f32.mrf.mxu0
        %v1165 = vadd.f32 0.0, %v1164
        %v1166 = vpop.f32.mrf.mxu0
        %v1167 = vadd.f32 0.0, %v1166
        %v1168 = vpop.f32.mrf.mxu0
        %v1169 = vadd.f32 0.0, %v1168
        %v1170 = vpop.f32.mrf.mxu0
        %v1171 = vadd.f32 0.0, %v1170
        %1172 = vdwg.mxu0
        %1173 = vmatprep.subr.bf16.mxu0 %v967
        %1174 = vmatpush1.bf16.msra.mxu0 %v966
        %1175 = vmatprep.subr.bf16.mxu0 %v963
        %1176 = vmatpush1.bf16.msra.mxu0 %v962
        %1177 = vmatprep.subr.bf16.mxu0 %v959
        %1178 = vmatpush1.bf16.msra.mxu0 %v958
        %1179 = vmatprep.subr.bf16.mxu0 %v955
        %1180 = vmatpush1.bf16.msra.mxu0 %v954
        %1181 = vmatprep.subr.bf16.mxu0 %v951
        %1182 = vmatpush1.bf16.msra.mxu0 %v950
        %1183 = vmatprep.subr.bf16.mxu0 %v947
        %1184 = vmatpush1.bf16.msra.mxu0 %v946
        %1185 = vmatprep.subr.bf16.mxu0 %v943
        %1186 = vmatpush1.bf16.msra.mxu0 %v942
        %1187 = vmatprep.subr.bf16.mxu0 %v939
        %1188 = vmatpush1.bf16.msra.mxu0 %v938
        %1189 = vmatprep.subr.bf16.mxu0 %v999
        %1190 = vmatpush2.bf16.msra.mxu0 %v998
        %1191 = vmatprep.subr.bf16.mxu0 %v995
        %1192 = vmatpush2.bf16.msra.mxu0 %v994
        %1193 = vmatprep.subr.bf16.mxu0 %v991
        %1194 = vmatpush2.bf16.msra.mxu0 %v990
        %1195 = vmatprep.subr.bf16.mxu0 %v987
        %1196 = vmatpush2.bf16.msra.mxu0 %v986
        %1197 = vmatprep.subr.bf16.mxu0 %v983
        %1198 = vmatpush2.bf16.msra.mxu0 %v982
        %1199 = vmatprep.subr.bf16.mxu0 %v979
        %1200 = vmatpush2.bf16.msra.mxu0 %v978
        %1201 = vmatprep.subr.bf16.mxu0 %v975
        %1202 = vmatpush2.bf16.msra.mxu0 %v974
        %1203 = vmatprep.subr.bf16.mxu0 %v971
        %1204 = vmatpush2.bf16.msra.mxu0 %v970
        %1205 = vmatprep.mubr.bf16.mxu0 %v485
        %1206 = vmatmul.mubr.bf16.gmra.mxu0 %v484
        %v1207 = vpop.f32.mrf.mxu0
        %v1208 = vadd.f32 %v1165, %v1207
        %v1209 = vpop.f32.mrf.mxu0
        %v1210 = vadd.f32 %v1167, %v1209
        %v1211 = vpop.f32.mrf.mxu0
        %v1212 = vadd.f32 %v1169, %v1211
        %v1213 = vpop.f32.mrf.mxu0
        %v1214 = vadd.f32 %v1171, %v1213
        %1215 = vdwg.mxu0
        %1216 = vmatprep.subr.bf16.mxu0 %v905
        %1217 = vmatpush1.bf16.msra.mxu0 %v904
        %1218 = vmatprep.subr.bf16.mxu0 %v901
        %1219 = vmatpush1.bf16.msra.mxu0 %v900
        %1220 = vmatprep.subr.bf16.mxu0 %v897
        %1221 = vmatpush1.bf16.msra.mxu0 %v896
        %1222 = vmatprep.subr.bf16.mxu0 %v893
        %1223 = vmatpush1.bf16.msra.mxu0 %v892
        %1224 = vmatprep.subr.bf16.mxu0 %v889
        %1225 = vmatpush1.bf16.msra.mxu0 %v888
        %1226 = vmatprep.subr.bf16.mxu0 %v885
        %1227 = vmatpush1.bf16.msra.mxu0 %v884
        %1228 = vmatprep.subr.bf16.mxu0 %v881
        %1229 = vmatpush1.bf16.msra.mxu0 %v880
        %1230 = vmatprep.subr.bf16.mxu0 %v877
        %1231 = vmatpush1.bf16.msra.mxu0 %v876
        %1232 = vmatprep.subr.bf16.mxu0 %v937
        %1233 = vmatpush2.bf16.msra.mxu0 %v936
        %1234 = vmatprep.subr.bf16.mxu0 %v933
        %1235 = vmatpush2.bf16.msra.mxu0 %v932
        %1236 = vmatprep.subr.bf16.mxu0 %v929
        %1237 = vmatpush2.bf16.msra.mxu0 %v928
        %1238 = vmatprep.subr.bf16.mxu0 %v925
        %1239 = vmatpush2.bf16.msra.mxu0 %v924
        %1240 = vmatprep.subr.bf16.mxu0 %v921
        %1241 = vmatpush2.bf16.msra.mxu0 %v920
        %1242 = vmatprep.subr.bf16.mxu0 %v917
        %1243 = vmatpush2.bf16.msra.mxu0 %v916
        %1244 = vmatprep.subr.bf16.mxu0 %v913
        %1245 = vmatpush2.bf16.msra.mxu0 %v912
        %1246 = vmatprep.subr.bf16.mxu0 %v909
        %1247 = vmatpush2.bf16.msra.mxu0 %v908
        %1248 = vmatprep.mubr.bf16.mxu0 %v483
        %1249 = vmatmul.mubr.bf16.gmra.mxu0 %v482
        %v1250 = vpop.f32.mrf.mxu0
        %v1251 = vadd.f32 0.0, %v1250
        %v1252 = vpop.f32.mrf.mxu0
        %v1253 = vadd.f32 0.0, %v1252
        %v1254 = vpop.f32.mrf.mxu0
        %v1255 = vadd.f32 0.0, %v1254
        %v1256 = vpop.f32.mrf.mxu0
        %v1257 = vadd.f32 0.0, %v1256
        %1258 = vdwg.mxu0
        %1259 = vmatprep.subr.bf16.mxu0 %v969
        %1260 = vmatpush1.bf16.msra.mxu0 %v968
        %1261 = vmatprep.subr.bf16.mxu0 %v965
        %1262 = vmatpush1.bf16.msra.mxu0 %v964
        %1263 = vmatprep.subr.bf16.mxu0 %v961
        %1264 = vmatpush1.bf16.msra.mxu0 %v960
        %1265 = vmatprep.subr.bf16.mxu0 %v957
        %1266 = vmatpush1.bf16.msra.mxu0 %v956
        %1267 = vmatprep.subr.bf16.mxu0 %v953
        %1268 = vmatpush1.bf16.msra.mxu0 %v952
        %1269 = vmatprep.subr.bf16.mxu0 %v949
        %1270 = vmatpush1.bf16.msra.mxu0 %v948
        %1271 = vmatprep.subr.bf16.mxu0 %v945
        %1272 = vmatpush1.bf16.msra.mxu0 %v944
        %1273 = vmatprep.subr.bf16.mxu0 %v941
        %1274 = vmatpush1.bf16.msra.mxu0 %v940
        %1275 = vmatprep.subr.bf16.mxu0 %v1001
        %1276 = vmatpush2.bf16.msra.mxu0 %v1000
        %1277 = vmatprep.subr.bf16.mxu0 %v997
        %1278 = vmatpush2.bf16.msra.mxu0 %v996
        %1279 = vmatprep.subr.bf16.mxu0 %v993
        %1280 = vmatpush2.bf16.msra.mxu0 %v992
        %1281 = vmatprep.subr.bf16.mxu0 %v989
        %1282 = vmatpush2.bf16.msra.mxu0 %v988
        %1283 = vmatprep.subr.bf16.mxu0 %v985
        %1284 = vmatpush2.bf16.msra.mxu0 %v984
        %1285 = vmatprep.subr.bf16.mxu0 %v981
        %1286 = vmatpush2.bf16.msra.mxu0 %v980
        %1287 = vmatprep.subr.bf16.mxu0 %v977
        %1288 = vmatpush2.bf16.msra.mxu0 %v976
        %1289 = vmatprep.subr.bf16.mxu0 %v973
        %1290 = vmatpush2.bf16.msra.mxu0 %v972
        %1291 = vmatprep.mubr.bf16.mxu0 %v485
        %1292 = vmatmul.mubr.bf16.gmra.mxu0 %v484
        %v1293 = vpop.f32.mrf.mxu0
        %v1294 = vadd.f32 %v1251, %v1293
        %v1295 = vpop.f32.mrf.mxu0
        %v1296 = vadd.f32 %v1253, %v1295
        %v1297 = vpop.f32.mrf.mxu0
        %v1298 = vadd.f32 %v1255, %v1297
        %v1299 = vpop.f32.mrf.mxu0
        %v1300 = vadd.f32 %v1257, %v1299
        %1301 = vdwg.mxu0
        %v1302 = vadd.f32 %v330, %v1208
        %v1303 = vadd.f32 %v331, %v1210
        %v1304 = vadd.f32 %v332, %v1294
        %v1305 = vadd.f32 %v333, %v1296
        %v1306 = vadd.f32 %v334, %v1212
        %v1307 = vadd.f32 %v335, %v1214
        %v1308 = vadd.f32 %v336, %v1298
        %v1309 = vadd.f32 %v337, %v1300
        %1310 = vst [vmem:[#allocation2] sm:$0xff] %v1302
        %1311 = vst [vmem:[#allocation2 + $0x8] sm:$0xff] %v1303
        %1312 = vst [vmem:[#allocation2 + $0x10] sm:$0xff] %v1304
        %1313 = vst [vmem:[#allocation2 + $0x18] sm:$0xff] %v1305
        %1314 = vst [vmem:[#allocation2 + $0x20] sm:$0xff] %v1306
        %1315 = vst [vmem:[#allocation2 + $0x28] sm:$0xff] %v1307
        %1316 = vst [vmem:[#allocation2 + $0x30] sm:$0xff] %v1308
        %1317 = vst [vmem:[#allocation2 + $0x38] sm:$0xff] %v1309
        %p1318 = scmp.eq.s32.totalorder %s30, 1
        // Predicated region
        $region49: #{tpu_custom_call.1} parent=31 // pred_check
          %p1319 = pneg %p1318
        $region50: #{tpu_custom_call.1} parent=31 // pred_check_branch
          %1321 = sbr.rel (%p1319) target = $region52
        $region51: #{tpu_custom_call.1} parent=31 // pred_region
          %v1322 = vld [vmem:[#allocation2 + $0x18] sm:$0xff]
          %v1323 = vld [vmem:[#allocation2 + $0x38] sm:$0xff]
          %v1324 = vld [vmem:[#allocation8 + $0x3] sm:$0x1]
          %v1326 = vlaneseq
          %v1327 = vshrl.u32 %v1326, 7
          %v1328 = vsub.s32 0, %v1327
          %v1329 = vrot.slane %v1324, %v1328
          %v1331 = vadd.f32 %v1322, %v1329
          %v1332 = vadd.f32 %v1323, %v1329
          %1333 = vst [vmem:[#allocation9] sm:$0xff] %v1331
          %1334 = vst [vmem:[#allocation9 + $0x8] sm:$0xff] %v1332
          %v1335 = vld [vmem:[#allocation2] sm:$0xff]
          %v1336 = vld [vmem:[#allocation2 + $0x20] sm:$0xff]
          %v1337 = vld [vmem:[#allocation8] sm:$0x1]
          %v1339 = vlaneseq
          %v1340 = vshrl.u32 %v1339, 7
          %v1341 = vsub.s32 0, %v1340
          %v1342 = vrot.slane %v1337, %v1341
          %v1344 = vadd.f32 %v1335, %v1342
          %v1345 = vadd.f32 %v1336, %v1342
          %1346 = vmax.xlane.f32.xlu0 %v1344
          %v1347 = vpop.xlane.xlu0 %1346
          %1348 = vmax.xlane.f32.xlu0 %v1345
          %v1349 = vpop.xlane.xlu0 %1348
          %v1350 = vsub.f32 %v1344, %v1347
          %v1351 = vsub.f32 %v1345, %v1349
          %v1352 = vmul.f32 %v1350, 1.442695
          %v1353 = vpow.pop %v1352
          %v1354 = vmul.f32 %v1351, 1.442695
          %v1355 = vpow.pop %v1354
          %1356 = vadd.xlane.f32.xlu0 %v1353
          %v1357 = vpop.xlane.xlu0 %1356
          %1358 = vadd.xlane.f32.xlu0 %v1355
          %v1359 = vpop.xlane.xlu0 %1358
          %v1360 = vrcp.pop %v1357
          %v1361 = vrcp.pop %v1359
          %v1362 = vmul.f32 %v1353, %v1360
          %v1363 = vmul.f32 %v1355, %v1361
          %v1364 = vadd.f32 %v1362, 0.0
          %v1365 = vadd.f32 %v1363, 0.0
          %v1366 = vadd.f32 %v1344, 0.0
          %v1367 = vadd.f32 %v1345, 0.0
          %v1368 = vld [vmem:[#allocation2 + $0x8] sm:$0xff]
          %v1369 = vld [vmem:[#allocation2 + $0x28] sm:$0xff]
          %v1370 = vld [vmem:[#allocation8 + $0x1] sm:$0x1]
          %v1372 = vlaneseq
          %v1373 = vshrl.u32 %v1372, 7
          %v1374 = vsub.s32 0, %v1373
          %v1375 = vrot.slane %v1370, %v1374
          %v1377 = vadd.f32 %v1368, %v1375
          %v1378 = vadd.f32 %v1369, %v1375
          %1379 = vmax.xlane.f32.xlu0 %v1377
          %v1380 = vpop.xlane.xlu0 %1379
          %1381 = vmax.xlane.f32.xlu0 %v1378
          %v1382 = vpop.xlane.xlu0 %1381
          %v1383 = vsub.f32 %v1377, %v1380
          %v1384 = vsub.f32 %v1378, %v1382
          %v1385 = vmul.f32 %v1383, 1.442695
          %v1386 = vpow.pop %v1385
          %v1387 = vmul.f32 %v1384, 1.442695
          %v1388 = vpow.pop %v1387
          %1389 = vadd.xlane.f32.xlu0 %v1386
          %v1390 = vpop.xlane.xlu0 %1389
          %1391 = vadd.xlane.f32.xlu0 %v1388
          %v1392 = vpop.xlane.xlu0 %1391
          %v1393 = vrcp.pop %v1390
          %v1394 = vrcp.pop %v1392
          %v1395 = vmul.f32 %v1386, %v1393
          %v1396 = vmul.f32 %v1388, %v1394
          %v1397 = vadd.f32 %v1364, %v1395
          %v1398 = vadd.f32 %v1365, %v1396
          %v1399 = vadd.f32 %v1366, %v1377
          %v1400 = vadd.f32 %v1367, %v1378
          %v1401 = vld [vmem:[#allocation2 + $0x10] sm:$0xff]
          %v1402 = vld [vmem:[#allocation2 + $0x30] sm:$0xff]
          %v1403 = vld [vmem:[#allocation8 + $0x2] sm:$0x1]
          %v1405 = vlaneseq
          %v1406 = vshrl.u32 %v1405, 7
          %v1407 = vsub.s32 0, %v1406
          %v1408 = vrot.slane %v1403, %v1407
          %v1410 = vadd.f32 %v1401, %v1408
          %v1411 = vadd.f32 %v1402, %v1408
          %1412 = vmax.xlane.f32.xlu0 %v1410
          %v1413 = vpop.xlane.xlu0 %1412
          %1414 = vmax.xlane.f32.xlu0 %v1411
          %v1415 = vpop.xlane.xlu0 %1414
          %v1416 = vsub.f32 %v1410, %v1413
          %v1417 = vsub.f32 %v1411, %v1415
          %v1418 = vmul.f32 %v1416, 1.442695
          %v1419 = vpow.pop %v1418
          %v1420 = vmul.f32 %v1417, 1.442695
          %v1421 = vpow.pop %v1420
          %1422 = vadd.xlane.f32.xlu0 %v1419
          %v1423 = vpop.xlane.xlu0 %1422
          %1424 = vadd.xlane.f32.xlu0 %v1421
          %v1425 = vpop.xlane.xlu0 %1424
          %v1426 = vrcp.pop %v1423
          %v1427 = vrcp.pop %v1425
          %v1428 = vmul.f32 %v1419, %v1426
          %v1429 = vmul.f32 %v1421, %v1427
          %v1430 = vadd.f32 %v1397, %v1428
          %v1431 = vadd.f32 %v1398, %v1429
          %v1432 = vadd.f32 %v1399, %v1410
          %v1433 = vadd.f32 %v1400, %v1411
          %v1434 = vmul.f32 %v1430, 0.33333334
          %v1435 = vmul.f32 %v1431, 0.33333334
          %1436 = vst [vmem:[#allocation10] sm:$0xff] %v1434
          %1437 = vst [vmem:[#allocation10 + $0x8] sm:$0xff] %v1435
          %v1438 = vmul.f32 %v1432, 0.33333334
          %v1439 = vmul.f32 %v1433, 0.33333334
          %1440 = vst [vmem:[#allocation12] sm:$0xff] %v1438
          %1441 = vst [vmem:[#allocation12 + $0x8] sm:$0xff] %v1439
        $region52: #{tpu_custom_call.1} parent=31 // pred_fallthru
          _
        // Predicated region
        $region53: #{tpu_custom_call.1} parent=31 // pred_check
          %p1442 = pneg %p130
        $region54: #{tpu_custom_call.1} parent=31 // pred_check_branch
          %1444 = sbr.rel (%p1442) target = $region56
        $region55: #{tpu_custom_call.1} parent=31 // pred_region
          %s1445 = smul.u32 2, %s29
          %s1447 = ssub.s32 256, 256
          %1448 = vsyncadd [#allocation5], %s1447
          %s1449 = smul.addr %s1445, 128
          %s1450 = scalar_lea.hbm %s3, %s1449
          %s1451 = sshll.u32 [#allocation9], 4
          %s1452 = int_to_ptr.vmem [resolvable:$true] %s1451
          %1457 = dma.vmem_to_hbm [thread:$0]  %s1452, 256, %s1450, [#allocation5], 128, 128, 8
        $region56: #{tpu_custom_call.1} parent=31 // pred_fallthru
          _
        // Predicated region
        $region57: #{tpu_custom_call.1} parent=31 // pred_check
          %p1458 = pneg %p156
        $region58: #{tpu_custom_call.1} parent=31 // pred_check_branch
          %1460 = sbr.rel (%p1458) target = $region60
        $region59: #{tpu_custom_call.1} parent=31 // pred_region
          %s1461 = smul.u32 2, %s29
          %s1463 = ssub.s32 256, 256
          %1464 = vsyncadd [#allocation11], %s1463
          %s1465 = smul.addr %s1461, 128
          %s1466 = scalar_lea.hbm %s4, %s1465
          %s1467 = sshll.u32 [#allocation10], 4
          %s1468 = int_to_ptr.vmem [resolvable:$true] %s1467
          %1473 = dma.vmem_to_hbm [thread:$0]  %s1468, 256, %s1466, [#allocation11], 128, 128, 8
        $region60: #{tpu_custom_call.1} parent=31 // pred_fallthru
          _
        // Predicated region
        $region61: #{tpu_custom_call.1} parent=31 // pred_check
          %p1474 = pneg %p182
        $region62: #{tpu_custom_call.1} parent=31 // pred_check_branch
          %1476 = sbr.rel (%p1474) target = $region64
        $region63: #{tpu_custom_call.1} parent=31 // pred_region
          %s1477 = smul.u32 2, %s29
          %s1479 = ssub.s32 256, 256
          %1480 = vsyncadd [#allocation11], %s1479
          %s1481 = smul.addr %s1477, 128
          %s1482 = scalar_lea.hbm %s5, %s1481
          %s1483 = sshll.u32 [#allocation12], 4
          %s1484 = int_to_ptr.vmem [resolvable:$true] %s1483
          %1489 = dma.vmem_to_hbm [thread:$0]  %s1484, 256, %s1482, [#allocation11], 128, 128, 8
        $region64: #{tpu_custom_call.1} parent=31 // pred_fallthru
          _
        // Predicated region
        $region65: #{tpu_custom_call.1} parent=31 // pred_check
          %p1490 = pneg %p130
        $region66: #{tpu_custom_call.1} parent=31 // pred_check_branch
          %1492 = sbr.rel (%p1490) target = $region68
        $region67: #{tpu_custom_call.1} parent=31 // pred_region
          %1493 = dma.done [#allocation5], 256
        $region68: #{tpu_custom_call.1} parent=31 // pred_fallthru
          _
        // Predicated region
        $region69: #{tpu_custom_call.1} parent=31 // pred_check
          %p1494 = pneg %p156
        $region70: #{tpu_custom_call.1} parent=31 // pred_check_branch
          %1496 = sbr.rel (%p1494) target = $region72
        $region71: #{tpu_custom_call.1} parent=31 // pred_region
          %1497 = dma.done [#allocation11], 256
        $region72: #{tpu_custom_call.1} parent=31 // pred_fallthru
          _
        // Predicated region
        $region73: #{tpu_custom_call.1} parent=31 // pred_check
          %p1498 = pneg %p182
        $region74: #{tpu_custom_call.1} parent=31 // pred_check_branch
          %1500 = sbr.rel (%p1498) target = $region76
        $region75: #{tpu_custom_call.1} parent=31 // pred_region
          %1501 = dma.done [#allocation11], 256
        $region76: #{tpu_custom_call.1} parent=31 // pred_fallthru
          _
      $region32: #{tpu_custom_call.1} parent=5 // pred_fallthru
        _
      %p1502 = scmp.le.s32.totalorder 2, %s20
      // Predicated region
      $region77: #{tpu_custom_call.1} parent=5 // pred_check
        %p1503 = pneg %p1502
      $region78: #{tpu_custom_call.1} parent=5 // pred_check_branch
        %1505 = sbr.rel (%p1503) target = $region80
      $region79: #{tpu_custom_call.1} parent=5 // pred_region
        %s1506 = ssub.s32 %s20, 2
      $region80: #{tpu_custom_call.1} parent=5 // pred_fallthru
        _
    $region6: #{tpu_custom_call.1} parent=1 // loop_footer
      %s24 = sadd.s32 1, %s20
    $region7: #{tpu_custom_call.1} parent=1 // loop_footer_branch
      %19 = sbr.rel target = $region3
    $region8: #{tpu_custom_call.1} parent=1 // loop_exit
      _
    %1507 = vsyncpa [#allocation4], 1
    %s1508 = scalar_lea.sflag [#allocation4], 1
    %1509 = vsyncpa %s1508, 1
    %1510 = vsyncpa [#allocation7], 1
    %s1511 = scalar_lea.sflag [#allocation7], 1
    %1512 = vsyncpa %s1511, 1
    %1513 = vsyncpa [#allocation5], 1
    %s1514 = scalar_lea.sflag [#allocation5], 1
    %1515 = vsyncpa %s1514, 1
    %1516 = vsyncpa [#allocation11], 1

</llo_original>
